<compile_context>
chip_gen: v7x
topology: tpu7x:2x2x1
jax: 0.10.0
libtpu: 0.0.40
codegen_flags: <defaults>
</compile_context>

<pallas_src>
import functools

import numpy as np
import jax
import jax.numpy as jnp
from jax.experimental import pallas as pl
from jax.experimental.pallas import tpu as pltpu


# ----------------------------------------------------------------------------
# Host-side glue (pure data movement of the external NCHW input, XLA-fused)
# ----------------------------------------------------------------------------
def conv1_patches_for_conv2(x, k1=8, s1=4, k2=4, s2=2):
    """conv1 im2col evaluated on the grid conv2 needs.

    Rows are ordered (conv2-window-offset w, conv2-output-position p2, batch b);
    columns are the conv1 patch in (cin, i1, j1) order.  Because a row gather
    commutes with bias+ReLU, evaluating conv1 on this grid lets the kernel
    build conv2's im2col with contiguous slices only (no selection matmuls)."""
    B, C, H, W = x.shape
    H1, W1 = (H - k1) // s1 + 1, (W - k1) // s1 + 1
    H2, W2 = (H1 - k2) // s2 + 1, (W1 - k2) // s2 + 1
    K1 = C * k1 * k1
    cols = []
    for i in range(k1):
        for j in range(k1):
            cols.append(x[:, :, i:i + s1 * H1:s1, j:j + s1 * W1:s1])      # [B,C,H1,W1]
    p = jnp.stack(cols, axis=2)                                           # [B,C,k1*k1,H1,W1]
    p = p.reshape(B, K1, H1, W1).transpose(0, 2, 3, 1)                    # [B,H1,W1,K1]
    blocks = []
    for i2 in range(k2):
        for j2 in range(k2):
            g = p[:, i2:i2 + s2 * H2:s2, j2:j2 + s2 * W2:s2, :]           # [B,H2,W2,K1]
            g = g.reshape(B, H2 * W2, K1).transpose(1, 0, 2)              # [(p2),B,K1]
            blocks.append(g)
    pg = jnp.stack(blocks, axis=0).reshape(k2 * k2 * H2 * W2 * B, K1)
    return pg, k2 * k2, (H2, W2)


def _merge_conv_weight(w):
    """PyTorch conv weight [Cout, Cin, kh, kw] -> K-merged [kh*kw*Cin, Cout]."""
    Cout, Cin, kh, kw = w.shape
    return jnp.transpose(w, (2, 3, 1, 0)).reshape(kh * kw * Cin, Cout)


def prepare_params(params):
    """One-time packing / bf16 casting of parameters for the fused kernel."""
    bf16, f32 = jnp.bfloat16, jnp.float32
    w1 = params["c1_w"].reshape(params["c1_w"].shape[0], -1).T.astype(bf16)   # [Cin*64, 32]
    b1 = params["c1_b"].reshape(1, -1).astype(f32)
    w2m = _merge_conv_weight(params["c2_w"]).astype(bf16)                     # [512, 64]
    b2 = params["c2_b"].reshape(1, -1).astype(f32)
    w3m = _merge_conv_weight(params["c3_w"]).astype(bf16)                     # [576, 64]
    b3 = params["c3_b"].reshape(1, -1).astype(f32)
    # heads, layer 1: advantage | value hidden weights concatenated (N = 1024)
    wh1 = jnp.concatenate([params["a1_w"], params["v1_w"]], axis=1).astype(bf16)
    bh1 = jnp.concatenate([params["a1_b"], params["v1_b"]]).reshape(1, -1).astype(f32)
    # heads, layer 2: advantage matmul weight only; value head is a VPU reduce
    wa2 = params["a2_w"].astype(bf16)                                         # [512, A]
    ba2 = params["a2_b"].reshape(1, -1).astype(f32)
    wv2 = params["v2_w"].reshape(1, -1).astype(f32)                           # [1, 512]
    bv2 = params["v2_b"].reshape(1, 1).astype(f32)
    return {"w1": w1, "b1": b1, "w2m": w2m, "b2": b2, "w3m": w3m, "b3": b3,
            "wh1": wh1, "bh1": bh1, "wa2": wa2, "ba2": ba2, "wv2": wv2, "bv2": bv2}


# ----------------------------------------------------------------------------
# The single fused Pallas kernel
# ----------------------------------------------------------------------------
def _fused_dqn_kernel(pg_ref, w1_ref, b1_ref, w2_ref, b2_ref, w3_ref, b3_ref,
                      bh1_ref, wa2_ref, ba2_ref, wv2_ref, bv2_ref, wh1_hbm_ref,
                      o_ref, wh1_vmem, dma_sem,
                      *, batch, n_pos2, n_off2, n_off3, num_actions):
    f32, bf16 = jnp.float32, jnp.bfloat16

    # Overlap the largest head-weight DMA (advantage|value hidden layer, only
    # needed at the very end) with the conv stack.
    head_cp = pltpu.make_async_copy(wh1_hbm_ref, wh1_vmem, dma_sem.at[0])
    head_cp.start()

    # ---- conv1, evaluated directly on the conv2-im2col grid: ONE matmul ----
    h1 = jnp.dot(pg_ref[...], w1_ref[...], preferred_element_type=f32)
    h1 = jnp.maximum(h1 + b1_ref[...], 0.0)            # [n_off2*n_pos2*B, 32] f32

    # ---- conv2: lane-concat the 16 contiguous offset blocks -> ONE K=512 dot
    rows2 = n_pos2 * batch
    p2 = jnp.concatenate(
        [h1[w * rows2:(w + 1) * rows2, :] for w in range(n_off2)], axis=-1)
    h2 = jnp.dot(p2.astype(bf16), w2_ref[...], preferred_element_type=f32)
    h2 = jnp.maximum(h2 + b2_ref[...], 0.0)            # [n_pos2*B, 64] f32, rows (s, b)

    # ---- conv3 (1x1 spatial output): lane-concat 9 blocks -> ONE K=576 dot --
    p3 = jnp.concatenate(
        [h2[s * batch:(s + 1) * batch, :] for s in range(n_off3)], axis=-1)
    feat = jnp.dot(p3.astype(bf16), w3_ref[...], preferred_element_type=f32)
    feat = jnp.maximum(feat + b3_ref[...], 0.0)        # [B, 64] f32

    # ---- heads: fused advantage|value hidden layer (lane-dense N=1024) ------
    head_cp.wait()
    hh = jnp.dot(feat.astype(bf16), wh1_vmem[...], preferred_element_type=f32)
    hh = jnp.maximum(hh + bh1_ref[...], 0.0)           # [B, 1024] f32

    hid = hh.shape[1] // 2
    adv = jnp.dot(hh[:, :hid].astype(bf16), wa2_ref[...],
                  preferred_element_type=f32) + ba2_ref[...]                 # [B, A]
    # 1-wide value head as a cheap VPU reduce epilogue (no half-zero matmul).
    val = jnp.sum(hh[:, hid:] * wv2_ref[...], axis=-1, keepdims=True) + bv2_ref[...]

    # dueling combine; mean over ALL advantage entries (torch advantage.mean())
    adv_mean = jnp.sum(adv, axis=(0, 1), keepdims=True) * (
        1.0 / float(batch * num_actions))
    o_ref[...] = (val + adv - adv_mean).astype(o_ref.dtype)


def _full_spec(shape):
    zeros = (0,) * len(shape)
    return pl.BlockSpec(shape, lambda i: zeros)


def dueling_cnn_dqn_forward(prep, x, *, num_actions):
    B = x.shape[0]
    pg, n_off2, (H2, W2) = conv1_patches_for_conv2(x)
    pg = pg.astype(jnp.bfloat16)
    n_pos2 = H2 * W2
    # The fused kernel assumes conv3's 3x3 window covers the whole conv2
    # output (i.e. conv3 output spatial is 1x1), true for this module's input.
    assert (H2, W2) == (3, 3), "fused kernel expects conv3 output spatial 1x1"
    n_off3 = n_pos2

    blocked = (pg, prep["w1"], prep["b1"], prep["w2m"], prep["b2"],
               prep["w3m"], prep["b3"], prep["bh1"], prep["wa2"], prep["ba2"],
               prep["wv2"], prep["bv2"])
    args = blocked + (prep["wh1"],)

    flops = 2 * (pg.shape[0] * pg.shape[1] * 32
                 + n_pos2 * B * prep["w2m"].shape[0] * 64
                 + B * prep["w3m"].shape[0] * 64
                 + B * prep["wh1"].shape[0] * prep["wh1"].shape[1]
                 + B * prep["wa2"].shape[0] * num_actions
                 + B * prep["wv2"].shape[1])
    bytes_accessed = (sum(int(a.size) * a.dtype.itemsize for a in args)
                      + B * num_actions * 4)

    return pl.pallas_call(
        functools.partial(_fused_dqn_kernel, batch=B, n_pos2=n_pos2,
                          n_off2=n_off2, n_off3=n_off3,
                          num_actions=num_actions),
        out_shape=jax.ShapeDtypeStruct((B, num_actions), jnp.float32),
        grid=(1,),
        in_specs=[_full_spec(a.shape) for a in blocked]
                 + [pl.BlockSpec(memory_space=pl.ANY)],
        out_specs=_full_spec((B, num_actions)),
        scratch_shapes=[pltpu.VMEM(prep["wh1"].shape, jnp.bfloat16),
                        pltpu.SemaphoreType.DMA((1,))],
        cost_estimate=pl.CostEstimate(flops=flops, transcendentals=0,
                                      bytes_accessed=bytes_accessed),
        compiler_params=pltpu.CompilerParams(
            dimension_semantics=("arbitrary",)),
    )(*args)


# ----------------------------------------------------------------------------
# Parameters (deterministic synthetic init, shapes from DuelingCnnDQN.__init__)
# ----------------------------------------------------------------------------
def init_params(key, in_channels, num_actions, feat_size):
    ks = jax.random.split(key, 14)

    def w(k, shape, fan_in):
        return jax.random.normal(k, shape, jnp.float32) * np.sqrt(2.0 / fan_in)

    return {
        "c1_w": w(ks[0], (32, in_channels, 8, 8), in_channels * 64),
        "c1_b": 0.05 * jax.random.normal(ks[1], (32,), jnp.float32),
        "c2_w": w(ks[2], (64, 32, 4, 4), 32 * 16),
        "c2_b": 0.05 * jax.random.normal(ks[3], (64,), jnp.float32),
        "c3_w": w(ks[4], (64, 64, 3, 3), 64 * 9),
        "c3_b": 0.05 * jax.random.normal(ks[5], (64,), jnp.float32),
        "a1_w": w(ks[6], (feat_size, 512), feat_size),
        "a1_b": 0.05 * jax.random.normal(ks[7], (512,), jnp.float32),
        "a2_w": w(ks[8], (512, num_actions), 512),
        "a2_b": 0.05 * jax.random.normal(ks[9], (num_actions,), jnp.float32),
        "v1_w": w(ks[10], (feat_size, 512), feat_size),
        "v1_b": 0.05 * jax.random.normal(ks[11], (512,), jnp.float32),
        "v2_w": w(ks[12], (512, 1), 512),
        "v2_b": 0.05 * jax.random.normal(ks[13], (1,), jnp.float32),
    }


# ----------------------------------------------------------------------------
# Pure-JAX reference (highest precision) for verification
# ----------------------------------------------------------------------------
def reference_forward(params, x):
    hp = jax.lax.Precision.HIGHEST

    def conv(h, w, b, s):
        y = jax.lax.conv_general_dilated(
            h, w, window_strides=(s, s), padding="VALID",
            dimension_numbers=("NCHW", "OIHW", "NCHW"), precision=hp)
        return jnp.maximum(y + b[None, :, None, None], 0.0)

    h = conv(x, params["c1_w"], params["c1_b"], 4)
    h = conv(h, params["c2_w"], params["c2_b"], 2)
    h = conv(h, params["c3_w"], params["c3_b"], 1)
    feat = h.reshape(h.shape[0], -1)
    ha = jnp.maximum(jnp.dot(feat, params["a1_w"], precision=hp) + params["a1_b"], 0.0)
    hv = jnp.maximum(jnp.dot(feat, params["v1_w"], precision=hp) + params["v1_b"], 0.0)
    adv = jnp.dot(ha, params["a2_w"], precision=hp) + params["a2_b"]
    val = jnp.dot(hv, params["v2_w"], precision=hp) + params["v2_b"]
    return val + adv - jnp.mean(adv)


if __name__ == "__main__":
    # NCHW input with spatial 36 so the conv stack (k8/s4 -> k4/s2 -> k3/s1)
    # yields 8 -> 3 -> 1 spatial and feature_size() = 64.
    B, C, H, W = 2, 4, 36, 36
    NUM_ACTIONS = 6

    key = jax.random.PRNGKey(0)
    kx, kp = jax.random.split(key)
    x = jax.random.normal(kx, (B, C, H, W), jnp.float32)

    h1sp = (H - 8) // 4 + 1
    h2sp = (h1sp - 4) // 2 + 1
    h3sp = (h2sp - 3) // 1 + 1
    feat_size = 64 * h3sp * h3sp

    params = init_params(kp, C, NUM_ACTIONS, feat_size)
    prep = prepare_params(params)

    fwd = jax.jit(functools.partial(dueling_cnn_dqn_forward, num_actions=NUM_ACTIONS))
    q = jax.block_until_ready(fwd(prep, x))
    q_ref = jax.block_until_ready(reference_forward(params, x))

    assert q.shape == (B, NUM_ACTIONS), q.shape
    max_err = float(jnp.max(jnp.abs(q - q_ref)))
    assert jnp.allclose(q, q_ref, rtol=5e-2, atol=5e-2), f"max abs err {max_err}"
    print("KERNEL_OK")
</pallas_src>

<mosaic_0001>
module attributes {stable_mosaic.version = 11 : i64} {
  func.func @_fused_dqn_kernel(%arg0: i32, %arg1: memref<288x256xbf16, #tpu.memory_space<vmem>>, %arg2: memref<256x32xbf16, #tpu.memory_space<vmem>>, %arg3: memref<1x32xf32, #tpu.memory_space<vmem>>, %arg4: memref<512x64xbf16, #tpu.memory_space<vmem>>, %arg5: memref<1x64xf32, #tpu.memory_space<vmem>>, %arg6: memref<576x64xbf16, #tpu.memory_space<vmem>>, %arg7: memref<1x64xf32, #tpu.memory_space<vmem>>, %arg8: memref<1x1024xf32, #tpu.memory_space<vmem>>, %arg9: memref<512x6xbf16, #tpu.memory_space<vmem>>, %arg10: memref<1x6xf32, #tpu.memory_space<vmem>>, %arg11: memref<1x512xf32, #tpu.memory_space<vmem>>, %arg12: memref<1x1xf32, #tpu.memory_space<vmem>>, %arg13: memref<64x1024xbf16, #tpu.memory_space<any>>, %arg14: memref<2x6xf32, #tpu.memory_space<vmem>>, %arg15: memref<64x1024xbf16, #tpu.memory_space<vmem>>, %arg16: memref<1x!tpu.dma_semaphore, #tpu.memory_space<semaphore_mem>>) attributes {dimension_semantics = [#tpu.dimension_semantics<arbitrary>], iteration_bounds = array<i64: 1>, scalar_prefetch = 0 : i64, scratch_operands = 2 : i64, tpu.core_type = #tpu.core_type<tc>, window_params = [{pipeline_mode = #tpu.pipeline_mode<synchronous>, transform_indices = @transform_0, window_bounds = array<i64: 288, 256>}, {pipeline_mode = #tpu.pipeline_mode<synchronous>, transform_indices = @transform_1, window_bounds = array<i64: 256, 32>}, {pipeline_mode = #tpu.pipeline_mode<synchronous>, transform_indices = @transform_2, window_bounds = array<i64: 1, 32>}, {pipeline_mode = #tpu.pipeline_mode<synchronous>, transform_indices = @transform_3, window_bounds = array<i64: 512, 64>}, {pipeline_mode = #tpu.pipeline_mode<synchronous>, transform_indices = @transform_4, window_bounds = array<i64: 1, 64>}, {pipeline_mode = #tpu.pipeline_mode<synchronous>, transform_indices = @transform_5, window_bounds = array<i64: 576, 64>}, {pipeline_mode = #tpu.pipeline_mode<synchronous>, transform_indices = @transform_6, window_bounds = array<i64: 1, 64>}, {pipeline_mode = #tpu.pipeline_mode<synchronous>, transform_indices = @transform_7, window_bounds = array<i64: 1, 1024>}, {pipeline_mode = #tpu.pipeline_mode<synchronous>, transform_indices = @transform_8, window_bounds = array<i64: 512, 6>}, {pipeline_mode = #tpu.pipeline_mode<synchronous>, transform_indices = @transform_9, window_bounds = array<i64: 1, 6>}, {pipeline_mode = #tpu.pipeline_mode<synchronous>, transform_indices = @transform_10, window_bounds = array<i64: 1, 512>}, {pipeline_mode = #tpu.pipeline_mode<synchronous>, transform_indices = @transform_11, window_bounds = array<i64: 1, 1>}, {}, {pipeline_mode = #tpu.pipeline_mode<synchronous>, transform_indices = @transform_13, window_bounds = array<i64: 2, 6>}]} {
    %c0_i32 = arith.constant 0 : i32
    %0 = tpu.memref_slice %arg16[%c0_i32] : memref<1x!tpu.dma_semaphore, #tpu.memory_space<semaphore_mem>> -> memref<1x!tpu.dma_semaphore, #tpu.memory_space<semaphore_mem>>
    %1 = tpu.memref_squeeze %0 : memref<1x!tpu.dma_semaphore, #tpu.memory_space<semaphore_mem>> -> memref<!tpu.dma_semaphore, #tpu.memory_space<semaphore_mem>>
    tpu.enqueue_dma source(%arg13 : memref<64x1024xbf16, #tpu.memory_space<any>>) target(%arg15 : memref<64x1024xbf16, #tpu.memory_space<vmem>>) target_semaphore(%1 : memref<!tpu.dma_semaphore, #tpu.memory_space<semaphore_mem>>)
    %c0 = arith.constant 0 : index
    %c0_0 = arith.constant 0 : index
    %2 = vector.load %arg1[%c0, %c0_0] : memref<288x256xbf16, #tpu.memory_space<vmem>>, vector<288x256xbf16>
    %c0_1 = arith.constant 0 : index
    %c0_2 = arith.constant 0 : index
    %3 = vector.load %arg2[%c0_1, %c0_2] : memref<256x32xbf16, #tpu.memory_space<vmem>>, vector<256x32xbf16>
    %cst = arith.constant dense<0.000000e+00> : vector<288x32xf32>
    %4 = tpu.matmul %2, %3, %cst {dimension_numbers = #tpu.dot_dimension_numbers<[1], [0], [0], [1], [0, 0, 1, 1], [], []>} : vector<288x256xbf16>, vector<256x32xbf16>, vector<288x32xf32> -> vector<288x32xf32>
    %c0_3 = arith.constant 0 : index
    %c0_4 = arith.constant 0 : index
    %5 = vector.load %arg3[%c0_3, %c0_4] : memref<1x32xf32, #tpu.memory_space<vmem>>, vector<1x32xf32>
    %6 = vector.broadcast %5 : vector<1x32xf32> to vector<288x32xf32>
    %7 = arith.addf %4, %6 : vector<288x32xf32>
    %cst_5 = arith.constant 0.000000e+00 : f32
    %8 = vector.broadcast %cst_5 : f32 to vector<288x32xf32>
    %9 = arith.maximumf %7, %8 : vector<288x32xf32>
    %10 = vector.extract_strided_slice %9 {offsets = [0, 0], sizes = [18, 32], strides = [1, 1]} : vector<288x32xf32> to vector<18x32xf32>
    %11 = vector.extract_strided_slice %9 {offsets = [18, 0], sizes = [18, 32], strides = [1, 1]} : vector<288x32xf32> to vector<18x32xf32>
    %12 = vector.extract_strided_slice %9 {offsets = [36, 0], sizes = [18, 32], strides = [1, 1]} : vector<288x32xf32> to vector<18x32xf32>
    %13 = vector.extract_strided_slice %9 {offsets = [54, 0], sizes = [18, 32], strides = [1, 1]} : vector<288x32xf32> to vector<18x32xf32>
    %14 = vector.extract_strided_slice %9 {offsets = [72, 0], sizes = [18, 32], strides = [1, 1]} : vector<288x32xf32> to vector<18x32xf32>
    %15 = vector.extract_strided_slice %9 {offsets = [90, 0], sizes = [18, 32], strides = [1, 1]} : vector<288x32xf32> to vector<18x32xf32>
    %16 = vector.extract_strided_slice %9 {offsets = [108, 0], sizes = [18, 32], strides = [1, 1]} : vector<288x32xf32> to vector<18x32xf32>
    %17 = vector.extract_strided_slice %9 {offsets = [126, 0], sizes = [18, 32], strides = [1, 1]} : vector<288x32xf32> to vector<18x32xf32>
    %18 = vector.extract_strided_slice %9 {offsets = [144, 0], sizes = [18, 32], strides = [1, 1]} : vector<288x32xf32> to vector<18x32xf32>
    %19 = vector.extract_strided_slice %9 {offsets = [162, 0], sizes = [18, 32], strides = [1, 1]} : vector<288x32xf32> to vector<18x32xf32>
    %20 = vector.extract_strided_slice %9 {offsets = [180, 0], sizes = [18, 32], strides = [1, 1]} : vector<288x32xf32> to vector<18x32xf32>
    %21 = vector.extract_strided_slice %9 {offsets = [198, 0], sizes = [18, 32], strides = [1, 1]} : vector<288x32xf32> to vector<18x32xf32>
    %22 = vector.extract_strided_slice %9 {offsets = [216, 0], sizes = [18, 32], strides = [1, 1]} : vector<288x32xf32> to vector<18x32xf32>
    %23 = vector.extract_strided_slice %9 {offsets = [234, 0], sizes = [18, 32], strides = [1, 1]} : vector<288x32xf32> to vector<18x32xf32>
    %24 = vector.extract_strided_slice %9 {offsets = [252, 0], sizes = [18, 32], strides = [1, 1]} : vector<288x32xf32> to vector<18x32xf32>
    %25 = vector.extract_strided_slice %9 {offsets = [270, 0], sizes = [18, 32], strides = [1, 1]} : vector<288x32xf32> to vector<18x32xf32>
    %26 = tpu.concatenate %10, %11, %12, %13, %14, %15, %16, %17, %18, %19, %20, %21, %22, %23, %24, %25 in 1 : vector<18x32xf32>, vector<18x32xf32>, vector<18x32xf32>, vector<18x32xf32>, vector<18x32xf32>, vector<18x32xf32>, vector<18x32xf32>, vector<18x32xf32>, vector<18x32xf32>, vector<18x32xf32>, vector<18x32xf32>, vector<18x32xf32>, vector<18x32xf32>, vector<18x32xf32>, vector<18x32xf32>, vector<18x32xf32> -> vector<18x512xf32>
    %27 = arith.truncf %26 : vector<18x512xf32> to vector<18x512xbf16>
    %c0_6 = arith.constant 0 : index
    %c0_7 = arith.constant 0 : index
    %28 = vector.load %arg4[%c0_6, %c0_7] : memref<512x64xbf16, #tpu.memory_space<vmem>>, vector<512x64xbf16>
    %cst_8 = arith.constant dense<0.000000e+00> : vector<18x64xf32>
    %29 = tpu.matmul %27, %28, %cst_8 {dimension_numbers = #tpu.dot_dimension_numbers<[1], [0], [0], [1], [0, 0, 1, 1], [], []>} : vector<18x512xbf16>, vector<512x64xbf16>, vector<18x64xf32> -> vector<18x64xf32>
    %c0_9 = arith.constant 0 : index
    %c0_10 = arith.constant 0 : index
    %30 = vector.load %arg5[%c0_9, %c0_10] : memref<1x64xf32, #tpu.memory_space<vmem>>, vector<1x64xf32>
    %31 = vector.broadcast %30 : vector<1x64xf32> to vector<18x64xf32>
    %32 = arith.addf %29, %31 : vector<18x64xf32>
    %cst_11 = arith.constant 0.000000e+00 : f32
    %33 = vector.broadcast %cst_11 : f32 to vector<18x64xf32>
    %34 = arith.maximumf %32, %33 : vector<18x64xf32>
    %35 = vector.extract_strided_slice %34 {offsets = [0, 0], sizes = [2, 64], strides = [1, 1]} : vector<18x64xf32> to vector<2x64xf32>
    %36 = vector.extract_strided_slice %34 {offsets = [2, 0], sizes = [2, 64], strides = [1, 1]} : vector<18x64xf32> to vector<2x64xf32>
    %37 = vector.extract_strided_slice %34 {offsets = [4, 0], sizes = [2, 64], strides = [1, 1]} : vector<18x64xf32> to vector<2x64xf32>
    %38 = vector.extract_strided_slice %34 {offsets = [6, 0], sizes = [2, 64], strides = [1, 1]} : vector<18x64xf32> to vector<2x64xf32>
    %39 = vector.extract_strided_slice %34 {offsets = [8, 0], sizes = [2, 64], strides = [1, 1]} : vector<18x64xf32> to vector<2x64xf32>
    %40 = vector.extract_strided_slice %34 {offsets = [10, 0], sizes = [2, 64], strides = [1, 1]} : vector<18x64xf32> to vector<2x64xf32>
    %41 = vector.extract_strided_slice %34 {offsets = [12, 0], sizes = [2, 64], strides = [1, 1]} : vector<18x64xf32> to vector<2x64xf32>
    %42 = vector.extract_strided_slice %34 {offsets = [14, 0], sizes = [2, 64], strides = [1, 1]} : vector<18x64xf32> to vector<2x64xf32>
    %43 = vector.extract_strided_slice %34 {offsets = [16, 0], sizes = [2, 64], strides = [1, 1]} : vector<18x64xf32> to vector<2x64xf32>
    %44 = tpu.concatenate %35, %36, %37, %38, %39, %40, %41, %42, %43 in 1 : vector<2x64xf32>, vector<2x64xf32>, vector<2x64xf32>, vector<2x64xf32>, vector<2x64xf32>, vector<2x64xf32>, vector<2x64xf32>, vector<2x64xf32>, vector<2x64xf32> -> vector<2x576xf32>
    %45 = arith.truncf %44 : vector<2x576xf32> to vector<2x576xbf16>
    %c0_12 = arith.constant 0 : index
    %c0_13 = arith.constant 0 : index
    %46 = vector.load %arg6[%c0_12, %c0_13] : memref<576x64xbf16, #tpu.memory_space<vmem>>, vector<576x64xbf16>
    %cst_14 = arith.constant dense<0.000000e+00> : vector<2x64xf32>
    %47 = tpu.matmul %45, %46, %cst_14 {dimension_numbers = #tpu.dot_dimension_numbers<[1], [0], [0], [1], [0, 0, 1, 1], [], []>} : vector<2x576xbf16>, vector<576x64xbf16>, vector<2x64xf32> -> vector<2x64xf32>
    %c0_15 = arith.constant 0 : index
    %c0_16 = arith.constant 0 : index
    %48 = vector.load %arg7[%c0_15, %c0_16] : memref<1x64xf32, #tpu.memory_space<vmem>>, vector<1x64xf32>
    %49 = vector.broadcast %48 : vector<1x64xf32> to vector<2x64xf32>
    %50 = arith.addf %47, %49 : vector<2x64xf32>
    %cst_17 = arith.constant 0.000000e+00 : f32
    %51 = vector.broadcast %cst_17 : f32 to vector<2x64xf32>
    %52 = arith.maximumf %50, %51 : vector<2x64xf32>
    %c0_i32_18 = arith.constant 0 : i32
    %53 = tpu.memref_slice %arg16[%c0_i32_18] : memref<1x!tpu.dma_semaphore, #tpu.memory_space<semaphore_mem>> -> memref<1x!tpu.dma_semaphore, #tpu.memory_space<semaphore_mem>>
    %54 = tpu.memref_squeeze %53 : memref<1x!tpu.dma_semaphore, #tpu.memory_space<semaphore_mem>> -> memref<!tpu.dma_semaphore, #tpu.memory_space<semaphore_mem>>
    tpu.wait_dma2 semaphore(%54 : memref<!tpu.dma_semaphore, #tpu.memory_space<semaphore_mem>>) src(%arg13 : memref<64x1024xbf16, #tpu.memory_space<any>>) dst(%arg15 : memref<64x1024xbf16, #tpu.memory_space<vmem>>)
    %55 = arith.truncf %52 : vector<2x64xf32> to vector<2x64xbf16>
    %c0_19 = arith.constant 0 : index
    %c0_20 = arith.constant 0 : index
    %56 = vector.load %arg15[%c0_19, %c0_20] : memref<64x1024xbf16, #tpu.memory_space<vmem>>, vector<64x1024xbf16>
    %cst_21 = arith.constant dense<0.000000e+00> : vector<2x1024xf32>
    %57 = tpu.matmul %55, %56, %cst_21 {dimension_numbers = #tpu.dot_dimension_numbers<[1], [0], [0], [1], [0, 0, 1, 1], [], []>} : vector<2x64xbf16>, vector<64x1024xbf16>, vector<2x1024xf32> -> vector<2x1024xf32>
    %c0_22 = arith.constant 0 : index
    %c0_23 = arith.constant 0 : index
    %58 = vector.load %arg8[%c0_22, %c0_23] : memref<1x1024xf32, #tpu.memory_space<vmem>>, vector<1x1024xf32>
    %59 = vector.broadcast %58 : vector<1x1024xf32> to vector<2x1024xf32>
    %60 = arith.addf %57, %59 : vector<2x1024xf32>
    %cst_24 = arith.constant 0.000000e+00 : f32
    %61 = vector.broadcast %cst_24 : f32 to vector<2x1024xf32>
    %62 = arith.maximumf %60, %61 : vector<2x1024xf32>
    %63 = vector.extract_strided_slice %62 {offsets = [0, 0], sizes = [2, 512], strides = [1, 1]} : vector<2x1024xf32> to vector<2x512xf32>
    %64 = arith.truncf %63 : vector<2x512xf32> to vector<2x512xbf16>
    %c0_25 = arith.constant 0 : index
    %c0_26 = arith.constant 0 : index
    %65 = vector.load %arg9[%c0_25, %c0_26] : memref<512x6xbf16, #tpu.memory_space<vmem>>, vector<512x6xbf16>
    %cst_27 = arith.constant dense<0.000000e+00> : vector<2x6xf32>
    %66 = tpu.matmul %64, %65, %cst_27 {dimension_numbers = #tpu.dot_dimension_numbers<[1], [0], [0], [1], [0, 0, 1, 1], [], []>} : vector<2x512xbf16>, vector<512x6xbf16>, vector<2x6xf32> -> vector<2x6xf32>
    %c0_28 = arith.constant 0 : index
    %c0_29 = arith.constant 0 : index
    %67 = vector.load %arg10[%c0_28, %c0_29] : memref<1x6xf32, #tpu.memory_space<vmem>>, vector<1x6xf32>
    %68 = vector.broadcast %67 : vector<1x6xf32> to vector<2x6xf32>
    %69 = arith.addf %66, %68 : vector<2x6xf32>
    %70 = vector.extract_strided_slice %62 {offsets = [0, 512], sizes = [2, 512], strides = [1, 1]} : vector<2x1024xf32> to vector<2x512xf32>
    %c0_30 = arith.constant 0 : index
    %c0_31 = arith.constant 0 : index
    %71 = vector.load %arg11[%c0_30, %c0_31] : memref<1x512xf32, #tpu.memory_space<vmem>>, vector<1x512xf32>
    %72 = vector.broadcast %71 : vector<1x512xf32> to vector<2x512xf32>
    %73 = arith.mulf %70, %72 : vector<2x512xf32>
    %cst_32 = arith.constant dense<0.000000e+00> : vector<2xf32>
    %74 = vector.multi_reduction <add>, %73, %cst_32 [1] : vector<2x512xf32> to vector<2xf32>
    %75 = vector.shape_cast %74 : vector<2xf32> to vector<2x1xf32>
    %c0_33 = arith.constant 0 : index
    %c0_34 = arith.constant 0 : index
    %76 = vector.load %arg12[%c0_33, %c0_34] : memref<1x1xf32, #tpu.memory_space<vmem>>, vector<1x1xf32>
    %77 = vector.broadcast %76 : vector<1x1xf32> to vector<2x1xf32>
    %78 = arith.addf %75, %77 : vector<2x1xf32>
    %79 = vector.shape_cast %69 : vector<2x6xf32> to vector<1x2x6xf32>
    %cst_35 = arith.constant dense<0.000000e+00> : vector<1xf32>
    %80 = vector.multi_reduction <add>, %79, %cst_35 [1, 2] : vector<1x2x6xf32> to vector<1xf32>
    %81 = vector.shape_cast %80 : vector<1xf32> to vector<1x1x1xf32>
    %82 = vector.extract %81[0, 0, 0] : f32 from vector<1x1x1xf32>
    %83 = vector.broadcast %82 : f32 to vector<1x1xf32>
    %cst_36 = arith.constant 0.0833333358 : f32
    %84 = vector.broadcast %cst_36 : f32 to vector<1x1xf32>
    %85 = arith.mulf %83, %84 : vector<1x1xf32>
    %86 = vector.broadcast %78 : vector<2x1xf32> to vector<2x6xf32>
    %87 = arith.addf %86, %69 : vector<2x6xf32>
    %88 = vector.broadcast %85 : vector<1x1xf32> to vector<2x6xf32>
    %89 = arith.subf %87, %88 : vector<2x6xf32>
    %c0_37 = arith.constant 0 : index
    %c0_38 = arith.constant 0 : index
    %90 = vector.load %arg14[%c0_37, %c0_38] : memref<2x6xf32, #tpu.memory_space<vmem>>, vector<2x6xf32>
    tpu.vector_store %arg14[%c0_37, %c0_38], %89 {strides = array<i32>} : memref<2x6xf32, #tpu.memory_space<vmem>>, vector<2x6xf32>,
    return
  }
  func.func @transform_0(%arg0: i32) -> (i32, i32) {
    %c0_i32 = arith.constant 0 : i32
    %c0_i32_0 = arith.constant 0 : i32
    %c0_i32_1 = arith.constant 0 : i32
    return %c0_i32, %c0_i32_0 : i32, i32
  }
  func.func @transform_1(%arg0: i32) -> (i32, i32) {
    %c0_i32 = arith.constant 0 : i32
    %c0_i32_0 = arith.constant 0 : i32
    %c0_i32_1 = arith.constant 0 : i32
    return %c0_i32, %c0_i32_0 : i32, i32
  }
  func.func @transform_2(%arg0: i32) -> (i32, i32) {
    %c0_i32 = arith.constant 0 : i32
    %c0_i32_0 = arith.constant 0 : i32
    %c0_i32_1 = arith.constant 0 : i32
    return %c0_i32, %c0_i32_0 : i32, i32
  }
  func.func @transform_3(%arg0: i32) -> (i32, i32) {
    %c0_i32 = arith.constant 0 : i32
    %c0_i32_0 = arith.constant 0 : i32
    %c0_i32_1 = arith.constant 0 : i32
    return %c0_i32, %c0_i32_0 : i32, i32
  }
  func.func @transform_4(%arg0: i32) -> (i32, i32) {
    %c0_i32 = arith.constant 0 : i32
    %c0_i32_0 = arith.constant 0 : i32
    %c0_i32_1 = arith.constant 0 : i32
    return %c0_i32, %c0_i32_0 : i32, i32
  }
  func.func @transform_5(%arg0: i32) -> (i32, i32) {
    %c0_i32 = arith.constant 0 : i32
    %c0_i32_0 = arith.constant 0 : i32
    %c0_i32_1 = arith.constant 0 : i32
    return %c0_i32, %c0_i32_0 : i32, i32
  }
  func.func @transform_6(%arg0: i32) -> (i32, i32) {
    %c0_i32 = arith.constant 0 : i32
    %c0_i32_0 = arith.constant 0 : i32
    %c0_i32_1 = arith.constant 0 : i32
    return %c0_i32, %c0_i32_0 : i32, i32
  }
  func.func @transform_7(%arg0: i32) -> (i32, i32) {
    %c0_i32 = arith.constant 0 : i32
    %c0_i32_0 = arith.constant 0 : i32
    %c0_i32_1 = arith.constant 0 : i32
    return %c0_i32, %c0_i32_0 : i32, i32
  }
  func.func @transform_8(%arg0: i32) -> (i32, i32) {
    %c0_i32 = arith.constant 0 : i32
    %c0_i32_0 = arith.constant 0 : i32
    %c0_i32_1 = arith.constant 0 : i32
    return %c0_i32, %c0_i32_0 : i32, i32
  }
  func.func @transform_9(%arg0: i32) -> (i32, i32) {
    %c0_i32 = arith.constant 0 : i32
    %c0_i32_0 = arith.constant 0 : i32
    %c0_i32_1 = arith.constant 0 : i32
    return %c0_i32, %c0_i32_0 : i32, i32
  }
  func.func @transform_10(%arg0: i32) -> (i32, i32) {
    %c0_i32 = arith.constant 0 : i32
    %c0_i32_0 = arith.constant 0 : i32
    %c0_i32_1 = arith.constant 0 : i32
    return %c0_i32, %c0_i32_0 : i32, i32
  }
  func.func @transform_11(%arg0: i32) -> (i32, i32) {
    %c0_i32 = arith.constant 0 : i32
    %c0_i32_0 = arith.constant 0 : i32
    %c0_i32_1 = arith.constant 0 : i32
    return %c0_i32, %c0_i32_0 : i32, i32
  }
  func.func @transform_13(%arg0: i32) -> (i32, i32) {
    %c0_i32 = arith.constant 0 : i32
    %c0_i32_0 = arith.constant 0 : i32
    %c0_i32_1 = arith.constant 0 : i32
    return %c0_i32, %c0_i32_0 : i32, i32
  }
}

</mosaic_0001>

<llo_original>
// kernel: dueling_cnn_dqn_forward.1
$region0: #{dueling_cnn_dqn_forward.1}
  #allocation0 [shape = 'u32[]', space=smem, size = 0x4, offset = 0x4, fixed_abs, tag = 'smem constant byte address 0x4 - core index']
  #allocation1 [shape = 'u32[144,128]{1,0:T(1,128)}', space=vmem, size = 0x12000, scoped, tag = 'internal scratch']
  #allocation2 [shape = 'bf16[64,1024]{1,0:T(16,128)(2,1)}', space=vmem, size = 0x20000, scoped, tag = 'scratch operand']
  #allocation3 [shape = 's32[1]{0}', space=sflag, size = 0x4, scoped, tag = 'scratch operand']
  #allocation4 [shape = 'f32[1,1]{1,0:T(1,128)S(1)}', space=vmem, size = 0x200, scoped, tag = 'scoped memory for dueling_cnn_dqn_forward.1']
  #allocation7 [shape = 's32[]', space=sflag, size = 0x4, offset = 0, fixed_abs, tag = 'sflag constant byte address 0x0 - dummy sync flag']
  %s0 = inlined_call_operand.vmem [shape: bf16[288,256], index: 0, kind: input, shape index: {}]
  %s1 = inlined_call_operand.vmem [shape: bf16[256,32], index: 1, kind: input, shape index: {}]
  %s2 = inlined_call_operand.vmem [shape: f32[1,32], index: 2, kind: input, shape index: {}]
  %s3 = inlined_call_operand.vmem [shape: bf16[512,64], index: 3, kind: input, shape index: {}]
  %s4 = inlined_call_operand.vmem [shape: f32[1,64], index: 4, kind: input, shape index: {}]
  %s5 = inlined_call_operand.vmem [shape: bf16[576,64], index: 5, kind: input, shape index: {}]
  %s6 = inlined_call_operand.vmem [shape: f32[1,64], index: 6, kind: input, shape index: {}]
  %s7 = inlined_call_operand.vmem [shape: f32[1,1024], index: 7, kind: input, shape index: {}]
  %s8 = inlined_call_operand.vmem [shape: bf16[512,6], index: 8, kind: input, shape index: {}]
  %s9 = inlined_call_operand.vmem [shape: f32[1,6], index: 9, kind: input, shape index: {}]
  %s10 = inlined_call_operand.vmem [shape: f32[1,512], index: 10, kind: input, shape index: {}]
  %s11 = inlined_call_operand.<no memory space> [shape: f32[1,1], index: 11, kind: input, shape index: {}]
  %s12 = inlined_call_operand.vmem [shape: bf16[64,1024], index: 12, kind: input, shape index: {}]
  %s13 = inlined_call_operand.hbm [shape: f32[2,6], index: 13, kind: output, shape index: {}]
  %s14 = sld [smem:[#allocation0]]
  $region95: #{dueling_cnn_dqn_forward.1} parent=0
    _
  %s16 = ssub.s32 1, %s14
  %s17 = scalar_select 0, %s16, %s14
  %v18 = vstv %s11
  %19 = vst [vmem:[#allocation4] sm:$0x1] %v18
  $region1: #{dueling_cnn_dqn_forward.1} parent=0
    #allocation5 [shape = 'u8[1024]{0}', space=vmem, size = 0x400, scoped, tag = 'output window, operand 0, single buffered']
    #allocation6 [shape = 's32[1]{0}', space=sflag, size = 0x4, scoped, tag = 'scoped memory for dueling_cnn_dqn_forward.1']
    %20 = vsyncpa [#allocation6], 0
    // Predicated region
    $region2: #{dueling_cnn_dqn_forward.1} parent=1 // pred_check
      _
    $region3: #{dueling_cnn_dqn_forward.1} parent=1 // pred_check_branch
      %22 = sbr.rel (0) target = $region5
    $region4: #{dueling_cnn_dqn_forward.1} parent=1 // pred_region
      _
    $region5: #{dueling_cnn_dqn_forward.1} parent=1 // pred_fallthru
      _
    // Predicated region
    $region6: #{dueling_cnn_dqn_forward.1} parent=1 // pred_check
      _
    $region7: #{dueling_cnn_dqn_forward.1} parent=1 // pred_check_branch
      %24 = sbr.rel (0) target = $region9
    $region8: #{dueling_cnn_dqn_forward.1} parent=1 // pred_region
      _
    $region9: #{dueling_cnn_dqn_forward.1} parent=1 // pred_fallthru
      _
    // Predicated region
    $region10: #{dueling_cnn_dqn_forward.1} parent=1 // pred_check
      _
    $region11: #{dueling_cnn_dqn_forward.1} parent=1 // pred_check_branch
      %26 = sbr.rel (0) target = $region13
    $region12: #{dueling_cnn_dqn_forward.1} parent=1 // pred_region
      _
    $region13: #{dueling_cnn_dqn_forward.1} parent=1 // pred_fallthru
      _
    // Predicated region
    $region14: #{dueling_cnn_dqn_forward.1} parent=1 // pred_check
      _
    $region15: #{dueling_cnn_dqn_forward.1} parent=1 // pred_check_branch
      %28 = sbr.rel (0) target = $region17
    $region16: #{dueling_cnn_dqn_forward.1} parent=1 // pred_region
      _
    $region17: #{dueling_cnn_dqn_forward.1} parent=1 // pred_fallthru
      _
    // Predicated region
    $region18: #{dueling_cnn_dqn_forward.1} parent=1 // pred_check
      _
    $region19: #{dueling_cnn_dqn_forward.1} parent=1 // pred_check_branch
      %30 = sbr.rel (0) target = $region21
    $region20: #{dueling_cnn_dqn_forward.1} parent=1 // pred_region
      _
    $region21: #{dueling_cnn_dqn_forward.1} parent=1 // pred_fallthru
      _
    // Predicated region
    $region22: #{dueling_cnn_dqn_forward.1} parent=1 // pred_check
      _
    $region23: #{dueling_cnn_dqn_forward.1} parent=1 // pred_check_branch
      %32 = sbr.rel (0) target = $region25
    $region24: #{dueling_cnn_dqn_forward.1} parent=1 // pred_region
      _
    $region25: #{dueling_cnn_dqn_forward.1} parent=1 // pred_fallthru
      _
    // Predicated region
    $region26: #{dueling_cnn_dqn_forward.1} parent=1 // pred_check
      _
    $region27: #{dueling_cnn_dqn_forward.1} parent=1 // pred_check_branch
      %34 = sbr.rel (0) target = $region29
    $region28: #{dueling_cnn_dqn_forward.1} parent=1 // pred_region
      _
    $region29: #{dueling_cnn_dqn_forward.1} parent=1 // pred_fallthru
      _
    // Predicated region
    $region30: #{dueling_cnn_dqn_forward.1} parent=1 // pred_check
      _
    $region31: #{dueling_cnn_dqn_forward.1} parent=1 // pred_check_branch
      %36 = sbr.rel (0) target = $region33
    $region32: #{dueling_cnn_dqn_forward.1} parent=1 // pred_region
      _
    $region33: #{dueling_cnn_dqn_forward.1} parent=1 // pred_fallthru
      _
    // Predicated region
    $region34: #{dueling_cnn_dqn_forward.1} parent=1 // pred_check
      _
    $region35: #{dueling_cnn_dqn_forward.1} parent=1 // pred_check_branch
      %38 = sbr.rel (0) target = $region37
    $region36: #{dueling_cnn_dqn_forward.1} parent=1 // pred_region
      _
    $region37: #{dueling_cnn_dqn_forward.1} parent=1 // pred_fallthru
      _
    // Predicated region
    $region38: #{dueling_cnn_dqn_forward.1} parent=1 // pred_check
      _
    $region39: #{dueling_cnn_dqn_forward.1} parent=1 // pred_check_branch
      %40 = sbr.rel (0) target = $region41
    $region40: #{dueling_cnn_dqn_forward.1} parent=1 // pred_region
      _
    $region41: #{dueling_cnn_dqn_forward.1} parent=1 // pred_fallthru
      _
    // Predicated region
    $region42: #{dueling_cnn_dqn_forward.1} parent=1 // pred_check
      _
    $region43: #{dueling_cnn_dqn_forward.1} parent=1 // pred_check_branch
      %42 = sbr.rel (0) target = $region45
    $region44: #{dueling_cnn_dqn_forward.1} parent=1 // pred_region
      _
    $region45: #{dueling_cnn_dqn_forward.1} parent=1 // pred_fallthru
      _
    // Predicated region
    $region46: #{dueling_cnn_dqn_forward.1} parent=1 // pred_check
      _
    $region47: #{dueling_cnn_dqn_forward.1} parent=1 // pred_check_branch
      %44 = sbr.rel (0) target = $region49
    $region48: #{dueling_cnn_dqn_forward.1} parent=1 // pred_region
      _
    $region49: #{dueling_cnn_dqn_forward.1} parent=1 // pred_fallthru
      _
    %p47 = scmp.lt.u32.totalorder 4, 8
    %p48 = pneg %p47
    // Predicated region
    $region50: #{dueling_cnn_dqn_forward.1} parent=1 // pred_check
      _
    $region51: #{dueling_cnn_dqn_forward.1} parent=1 // pred_check_branch
      %50 = sbr.rel (%p47) target = $region53
    $region52: #{dueling_cnn_dqn_forward.1} parent=1 // pred_region
      %s191 = sand.u32 4, 7
      %p192 = scmp.eq.s32.totalorder %s191, 0
      %p193 = pneg %p192
      // Predicated region
      $region65: #{dueling_cnn_dqn_forward.1} parent=52 // pred_check
        _
      $region66: #{dueling_cnn_dqn_forward.1} parent=52 // pred_check_branch
        %195 = sbr.rel (%p192) target = $region68
      $region67: #{dueling_cnn_dqn_forward.1} parent=52 // pred_region
        %s196 = sand.u32 4, 7
        %s197 = ssub.s32 4, %s196
        %s198 = scalar_lea.vmem %s12, %s197
        %s199 = ssub.s32 4, %s196
        %s200 = scalar_lea.vmem [#allocation2], %s199
        loop: start=0, step=1, limit=1
        $region69: #{dueling_cnn_dqn_forward.1} parent=67 // loop_pre_header
          _
        $region70: #{dueling_cnn_dqn_forward.1} parent=67 // loop_header
          %s202 = sphi 0, %s206
          %p203 = scmp.ge.s32.totalorder %s202, 1
          %s207 = sphi %s12, %s12
          %s208 = sphi [#allocation2], [#allocation2]
        $region71: #{dueling_cnn_dqn_forward.1} parent=67 // loop_header_branch
          %205 = sbr.rel (%p203) target = $region75
        $region72: #{dueling_cnn_dqn_forward.1} parent=67 // loop_body
          _
        $region73: #{dueling_cnn_dqn_forward.1} parent=67 // loop_footer
          %s206 = sadd.s32 1, %s202
        $region74: #{dueling_cnn_dqn_forward.1} parent=67 // loop_footer_branch
          %201 = sbr.rel target = $region70
        $region75: #{dueling_cnn_dqn_forward.1} parent=67 // loop_exit
          _
        %s209 = sshllo.u32 0, %s196
        loop: start=0, step=1, limit=1
        $region76: #{dueling_cnn_dqn_forward.1} parent=67 // loop_pre_header
          _
        $region77: #{dueling_cnn_dqn_forward.1} parent=67 // loop_header
          %s211 = sphi 0, %s215
          %p212 = scmp.ge.s32.totalorder %s211, 1
          %s216 = sphi %s198, %s198
          %s217 = sphi %s200, %s200
        $region78: #{dueling_cnn_dqn_forward.1} parent=67 // loop_header_branch
          %214 = sbr.rel (%p212) target = $region82
        $region79: #{dueling_cnn_dqn_forward.1} parent=67 // loop_body
          %v218 = vld [vmem:[%s216] sm:%s209]
          %219 = vst [vmem:[%s217] sm:%s209] %v218
          %v220 = vld [vmem:[%s216 + $0x20] sm:%s209]
          %221 = vst [vmem:[%s217 + $0x4] sm:%s209] %v220
          %v222 = vld [vmem:[%s216 + $0x4] sm:%s209]
          %223 = vst [vmem:[%s217 + $0x8] sm:%s209] %v222
          %v224 = vld [vmem:[%s216 + $0x24] sm:%s209]
          %225 = vst [vmem:[%s217 + $0xc] sm:%s209] %v224
          %v226 = vld [vmem:[%s216 + $0x8] sm:%s209]
          %227 = vst [vmem:[%s217 + $0x10] sm:%s209] %v226
          %v228 = vld [vmem:[%s216 + $0x28] sm:%s209]
          %229 = vst [vmem:[%s217 + $0x14] sm:%s209] %v228
          %v230 = vld [vmem:[%s216 + $0xc] sm:%s209]
          %231 = vst [vmem:[%s217 + $0x18] sm:%s209] %v230
          %v232 = vld [vmem:[%s216 + $0x2c] sm:%s209]
          %233 = vst [vmem:[%s217 + $0x1c] sm:%s209] %v232
          %v234 = vld [vmem:[%s216 + $0x10] sm:%s209]
          %235 = vst [vmem:[%s217 + $0x20] sm:%s209] %v234
          %v236 = vld [vmem:[%s216 + $0x30] sm:%s209]
          %237 = vst [vmem:[%s217 + $0x24] sm:%s209] %v236
          %v238 = vld [vmem:[%s216 + $0x14] sm:%s209]
          %239 = vst [vmem:[%s217 + $0x28] sm:%s209] %v238
          %v240 = vld [vmem:[%s216 + $0x34] sm:%s209]
          %241 = vst [vmem:[%s217 + $0x2c] sm:%s209] %v240
          %v242 = vld [vmem:[%s216 + $0x18] sm:%s209]
          %243 = vst [vmem:[%s217 + $0x30] sm:%s209] %v242
          %v244 = vld [vmem:[%s216 + $0x38] sm:%s209]
          %245 = vst [vmem:[%s217 + $0x34] sm:%s209] %v244
          %v246 = vld [vmem:[%s216 + $0x1c] sm:%s209]
          %247 = vst [vmem:[%s217 + $0x38] sm:%s209] %v246
          %v248 = vld [vmem:[%s216 + $0x3c] sm:%s209]
          %249 = vst [vmem:[%s217 + $0x3c] sm:%s209] %v248
          %v250 = vld [vmem:[%s216 + $0x40] sm:%s209]
          %251 = vst [vmem:[%s217 + $0x40] sm:%s209] %v250
          %v252 = vld [vmem:[%s216 + $0x60] sm:%s209]
          %253 = vst [vmem:[%s217 + $0x44] sm:%s209] %v252
          %v254 = vld [vmem:[%s216 + $0x44] sm:%s209]
          %255 = vst [vmem:[%s217 + $0x48] sm:%s209] %v254
          %v256 = vld [vmem:[%s216 + $0x64] sm:%s209]
          %257 = vst [vmem:[%s217 + $0x4c] sm:%s209] %v256
          %v258 = vld [vmem:[%s216 + $0x48] sm:%s209]
          %259 = vst [vmem:[%s217 + $0x50] sm:%s209] %v258
          %v260 = vld [vmem:[%s216 + $0x68] sm:%s209]
          %261 = vst [vmem:[%s217 + $0x54] sm:%s209] %v260
          %v262 = vld [vmem:[%s216 + $0x4c] sm:%s209]
          %263 = vst [vmem:[%s217 + $0x58] sm:%s209] %v262
          %v264 = vld [vmem:[%s216 + $0x6c] sm:%s209]
          %265 = vst [vmem:[%s217 + $0x5c] sm:%s209] %v264
          %v266 = vld [vmem:[%s216 + $0x50] sm:%s209]
          %267 = vst [vmem:[%s217 + $0x60] sm:%s209] %v266
          %v268 = vld [vmem:[%s216 + $0x70] sm:%s209]
          %269 = vst [vmem:[%s217 + $0x64] sm:%s209] %v268
          %v270 = vld [vmem:[%s216 + $0x54] sm:%s209]
          %271 = vst [vmem:[%s217 + $0x68] sm:%s209] %v270
          %v272 = vld [vmem:[%s216 + $0x74] sm:%s209]
          %273 = vst [vmem:[%s217 + $0x6c] sm:%s209] %v272
          %v274 = vld [vmem:[%s216 + $0x58] sm:%s209]
          %275 = vst [vmem:[%s217 + $0x70] sm:%s209] %v274
          %v276 = vld [vmem:[%s216 + $0x78] sm:%s209]
          %277 = vst [vmem:[%s217 + $0x74] sm:%s209] %v276
          %v278 = vld [vmem:[%s216 + $0x5c] sm:%s209]
          %279 = vst [vmem:[%s217 + $0x78] sm:%s209] %v278
          %v280 = vld [vmem:[%s216 + $0x7c] sm:%s209]
          %281 = vst [vmem:[%s217 + $0x7c] sm:%s209] %v280
          %v282 = vld [vmem:[%s216 + $0x80] sm:%s209]
          %283 = vst [vmem:[%s217 + $0x80] sm:%s209] %v282
          %v284 = vld [vmem:[%s216 + $0xa0] sm:%s209]
          %285 = vst [vmem:[%s217 + $0x84] sm:%s209] %v284
          %v286 = vld [vmem:[%s216 + $0x84] sm:%s209]
          %287 = vst [vmem:[%s217 + $0x88] sm:%s209] %v286
          %v288 = vld [vmem:[%s216 + $0xa4] sm:%s209]
          %289 = vst [vmem:[%s217 + $0x8c] sm:%s209] %v288
          %v290 = vld [vmem:[%s216 + $0x88] sm:%s209]
          %291 = vst [vmem:[%s217 + $0x90] sm:%s209] %v290
          %v292 = vld [vmem:[%s216 + $0xa8] sm:%s209]
          %293 = vst [vmem:[%s217 + $0x94] sm:%s209] %v292
          %v294 = vld [vmem:[%s216 + $0x8c] sm:%s209]
          %295 = vst [vmem:[%s217 + $0x98] sm:%s209] %v294
          %v296 = vld [vmem:[%s216 + $0xac] sm:%s209]
          %297 = vst [vmem:[%s217 + $0x9c] sm:%s209] %v296
          %v298 = vld [vmem:[%s216 + $0x90] sm:%s209]
          %299 = vst [vmem:[%s217 + $0xa0] sm:%s209] %v298
          %v300 = vld [vmem:[%s216 + $0xb0] sm:%s209]
          %301 = vst [vmem:[%s217 + $0xa4] sm:%s209] %v300
          %v302 = vld [vmem:[%s216 + $0x94] sm:%s209]
          %303 = vst [vmem:[%s217 + $0xa8] sm:%s209] %v302
          %v304 = vld [vmem:[%s216 + $0xb4] sm:%s209]
          %305 = vst [vmem:[%s217 + $0xac] sm:%s209] %v304
          %v306 = vld [vmem:[%s216 + $0x98] sm:%s209]
          %307 = vst [vmem:[%s217 + $0xb0] sm:%s209] %v306
          %v308 = vld [vmem:[%s216 + $0xb8] sm:%s209]
          %309 = vst [vmem:[%s217 + $0xb4] sm:%s209] %v308
          %v310 = vld [vmem:[%s216 + $0x9c] sm:%s209]
          %311 = vst [vmem:[%s217 + $0xb8] sm:%s209] %v310
          %v312 = vld [vmem:[%s216 + $0xbc] sm:%s209]
          %313 = vst [vmem:[%s217 + $0xbc] sm:%s209] %v312
          %v314 = vld [vmem:[%s216 + $0xc0] sm:%s209]
          %315 = vst [vmem:[%s217 + $0xc0] sm:%s209] %v314
          %v316 = vld [vmem:[%s216 + $0xe0] sm:%s209]
          %317 = vst [vmem:[%s217 + $0xc4] sm:%s209] %v316
          %v318 = vld [vmem:[%s216 + $0xc4] sm:%s209]
          %319 = vst [vmem:[%s217 + $0xc8] sm:%s209] %v318
          %v320 = vld [vmem:[%s216 + $0xe4] sm:%s209]
          %321 = vst [vmem:[%s217 + $0xcc] sm:%s209] %v320
          %v322 = vld [vmem:[%s216 + $0xc8] sm:%s209]
          %323 = vst [vmem:[%s217 + $0xd0] sm:%s209] %v322
          %v324 = vld [vmem:[%s216 + $0xe8] sm:%s209]
          %325 = vst [vmem:[%s217 + $0xd4] sm:%s209] %v324
          %v326 = vld [vmem:[%s216 + $0xcc] sm:%s209]
          %327 = vst [vmem:[%s217 + $0xd8] sm:%s209] %v326
          %v328 = vld [vmem:[%s216 + $0xec] sm:%s209]
          %329 = vst [vmem:[%s217 + $0xdc] sm:%s209] %v328
          %v330 = vld [vmem:[%s216 + $0xd0] sm:%s209]
          %331 = vst [vmem:[%s217 + $0xe0] sm:%s209] %v330
          %v332 = vld [vmem:[%s216 + $0xf0] sm:%s209]
          %333 = vst [vmem:[%s217 + $0xe4] sm:%s209] %v332
          %v334 = vld [vmem:[%s216 + $0xd4] sm:%s209]
          %335 = vst [vmem:[%s217 + $0xe8] sm:%s209] %v334
          %v336 = vld [vmem:[%s216 + $0xf4] sm:%s209]
          %337 = vst [vmem:[%s217 + $0xec] sm:%s209] %v336
          %v338 = vld [vmem:[%s216 + $0xd8] sm:%s209]
          %339 = vst [vmem:[%s217 + $0xf0] sm:%s209] %v338
          %v340 = vld [vmem:[%s216 + $0xf8] sm:%s209]
          %341 = vst [vmem:[%s217 + $0xf4] sm:%s209] %v340
          %v342 = vld [vmem:[%s216 + $0xdc] sm:%s209]
          %343 = vst [vmem:[%s217 + $0xf8] sm:%s209] %v342
          %v344 = vld [vmem:[%s216 + $0xfc] sm:%s209]
          %345 = vst [vmem:[%s217 + $0xfc] sm:%s209] %v344
        $region80: #{dueling_cnn_dqn_forward.1} parent=67 // loop_footer
          %s215 = sadd.s32 1, %s211
        $region81: #{dueling_cnn_dqn_forward.1} parent=67 // loop_footer_branch
          %210 = sbr.rel target = $region77
        $region82: #{dueling_cnn_dqn_forward.1} parent=67 // loop_exit
          _
      $region68: #{dueling_cnn_dqn_forward.1} parent=52 // pred_fallthru
        _
    $region53: #{dueling_cnn_dqn_forward.1} parent=1 // pred_fallthru
      _
    // Predicated region
    $region54: #{dueling_cnn_dqn_forward.1} parent=1 // pred_check
      %p51 = pneg %p47
    $region55: #{dueling_cnn_dqn_forward.1} parent=1 // pred_check_branch
      %53 = sbr.rel (%p51) target = $region57
    $region56: #{dueling_cnn_dqn_forward.1} parent=1 // pred_region
      %s54 = sshllo.u32 0, 4
      loop: start=0, step=1, limit=1
      $region58: #{dueling_cnn_dqn_forward.1} parent=56 // loop_pre_header
        _
      $region59: #{dueling_cnn_dqn_forward.1} parent=56 // loop_header
        %s56 = sphi 0, %s60
        %p57 = scmp.ge.s32.totalorder %s56, 1
        %s61 = sphi %s12, %s12
        %s62 = sphi [#allocation2], [#allocation2]
      $region60: #{dueling_cnn_dqn_forward.1} parent=56 // loop_header_branch
        %59 = sbr.rel (%p57) target = $region64
      $region61: #{dueling_cnn_dqn_forward.1} parent=56 // loop_body
        %v63 = vld [vmem:[%s61] sm:%s54]
        %64 = vst [vmem:[%s62] sm:%s54] %v63
        %v65 = vld [vmem:[%s61 + $0x20] sm:%s54]
        %66 = vst [vmem:[%s62 + $0x4] sm:%s54] %v65
        %v67 = vld [vmem:[%s61 + $0x4] sm:%s54]
        %68 = vst [vmem:[%s62 + $0x8] sm:%s54] %v67
        %v69 = vld [vmem:[%s61 + $0x24] sm:%s54]
        %70 = vst [vmem:[%s62 + $0xc] sm:%s54] %v69
        %v71 = vld [vmem:[%s61 + $0x8] sm:%s54]
        %72 = vst [vmem:[%s62 + $0x10] sm:%s54] %v71
        %v73 = vld [vmem:[%s61 + $0x28] sm:%s54]
        %74 = vst [vmem:[%s62 + $0x14] sm:%s54] %v73
        %v75 = vld [vmem:[%s61 + $0xc] sm:%s54]
        %76 = vst [vmem:[%s62 + $0x18] sm:%s54] %v75
        %v77 = vld [vmem:[%s61 + $0x2c] sm:%s54]
        %78 = vst [vmem:[%s62 + $0x1c] sm:%s54] %v77
        %v79 = vld [vmem:[%s61 + $0x10] sm:%s54]
        %80 = vst [vmem:[%s62 + $0x20] sm:%s54] %v79
        %v81 = vld [vmem:[%s61 + $0x30] sm:%s54]
        %82 = vst [vmem:[%s62 + $0x24] sm:%s54] %v81
        %v83 = vld [vmem:[%s61 + $0x14] sm:%s54]
        %84 = vst [vmem:[%s62 + $0x28] sm:%s54] %v83
        %v85 = vld [vmem:[%s61 + $0x34] sm:%s54]
        %86 = vst [vmem:[%s62 + $0x2c] sm:%s54] %v85
        %v87 = vld [vmem:[%s61 + $0x18] sm:%s54]
        %88 = vst [vmem:[%s62 + $0x30] sm:%s54] %v87
        %v89 = vld [vmem:[%s61 + $0x38] sm:%s54]
        %90 = vst [vmem:[%s62 + $0x34] sm:%s54] %v89
        %v91 = vld [vmem:[%s61 + $0x1c] sm:%s54]
        %92 = vst [vmem:[%s62 + $0x38] sm:%s54] %v91
        %v93 = vld [vmem:[%s61 + $0x3c] sm:%s54]
        %94 = vst [vmem:[%s62 + $0x3c] sm:%s54] %v93
        %v95 = vld [vmem:[%s61 + $0x40] sm:%s54]
        %96 = vst [vmem:[%s62 + $0x40] sm:%s54] %v95
        %v97 = vld [vmem:[%s61 + $0x60] sm:%s54]
        %98 = vst [vmem:[%s62 + $0x44] sm:%s54] %v97
        %v99 = vld [vmem:[%s61 + $0x44] sm:%s54]
        %100 = vst [vmem:[%s62 + $0x48] sm:%s54] %v99
        %v101 = vld [vmem:[%s61 + $0x64] sm:%s54]
        %102 = vst [vmem:[%s62 + $0x4c] sm:%s54] %v101
        %v103 = vld [vmem:[%s61 + $0x48] sm:%s54]
        %104 = vst [vmem:[%s62 + $0x50] sm:%s54] %v103
        %v105 = vld [vmem:[%s61 + $0x68] sm:%s54]
        %106 = vst [vmem:[%s62 + $0x54] sm:%s54] %v105
        %v107 = vld [vmem:[%s61 + $0x4c] sm:%s54]
        %108 = vst [vmem:[%s62 + $0x58] sm:%s54] %v107
        %v109 = vld [vmem:[%s61 + $0x6c] sm:%s54]
        %110 = vst [vmem:[%s62 + $0x5c] sm:%s54] %v109
        %v111 = vld [vmem:[%s61 + $0x50] sm:%s54]
        %112 = vst [vmem:[%s62 + $0x60] sm:%s54] %v111
        %v113 = vld [vmem:[%s61 + $0x70] sm:%s54]
        %114 = vst [vmem:[%s62 + $0x64] sm:%s54] %v113
        %v115 = vld [vmem:[%s61 + $0x54] sm:%s54]
        %116 = vst [vmem:[%s62 + $0x68] sm:%s54] %v115
        %v117 = vld [vmem:[%s61 + $0x74] sm:%s54]
        %118 = vst [vmem:[%s62 + $0x6c] sm:%s54] %v117
        %v119 = vld [vmem:[%s61 + $0x58] sm:%s54]
        %120 = vst [vmem:[%s62 + $0x70] sm:%s54] %v119
        %v121 = vld [vmem:[%s61 + $0x78] sm:%s54]
        %122 = vst [vmem:[%s62 + $0x74] sm:%s54] %v121
        %v123 = vld [vmem:[%s61 + $0x5c] sm:%s54]
        %124 = vst [vmem:[%s62 + $0x78] sm:%s54] %v123
        %v125 = vld [vmem:[%s61 + $0x7c] sm:%s54]
        %126 = vst [vmem:[%s62 + $0x7c] sm:%s54] %v125
        %v127 = vld [vmem:[%s61 + $0x80] sm:%s54]
        %128 = vst [vmem:[%s62 + $0x80] sm:%s54] %v127
        %v129 = vld [vmem:[%s61 + $0xa0] sm:%s54]
        %130 = vst [vmem:[%s62 + $0x84] sm:%s54] %v129
        %v131 = vld [vmem:[%s61 + $0x84] sm:%s54]
        %132 = vst [vmem:[%s62 + $0x88] sm:%s54] %v131
        %v133 = vld [vmem:[%s61 + $0xa4] sm:%s54]
        %134 = vst [vmem:[%s62 + $0x8c] sm:%s54] %v133
        %v135 = vld [vmem:[%s61 + $0x88] sm:%s54]
        %136 = vst [vmem:[%s62 + $0x90] sm:%s54] %v135
        %v137 = vld [vmem:[%s61 + $0xa8] sm:%s54]
        %138 = vst [vmem:[%s62 + $0x94] sm:%s54] %v137
        %v139 = vld [vmem:[%s61 + $0x8c] sm:%s54]
        %140 = vst [vmem:[%s62 + $0x98] sm:%s54] %v139
        %v141 = vld [vmem:[%s61 + $0xac] sm:%s54]
        %142 = vst [vmem:[%s62 + $0x9c] sm:%s54] %v141
        %v143 = vld [vmem:[%s61 + $0x90] sm:%s54]
        %144 = vst [vmem:[%s62 + $0xa0] sm:%s54] %v143
        %v145 = vld [vmem:[%s61 + $0xb0] sm:%s54]
        %146 = vst [vmem:[%s62 + $0xa4] sm:%s54] %v145
        %v147 = vld [vmem:[%s61 + $0x94] sm:%s54]
        %148 = vst [vmem:[%s62 + $0xa8] sm:%s54] %v147
        %v149 = vld [vmem:[%s61 + $0xb4] sm:%s54]
        %150 = vst [vmem:[%s62 + $0xac] sm:%s54] %v149
        %v151 = vld [vmem:[%s61 + $0x98] sm:%s54]
        %152 = vst [vmem:[%s62 + $0xb0] sm:%s54] %v151
        %v153 = vld [vmem:[%s61 + $0xb8] sm:%s54]
        %154 = vst [vmem:[%s62 + $0xb4] sm:%s54] %v153
        %v155 = vld [vmem:[%s61 + $0x9c] sm:%s54]
        %156 = vst [vmem:[%s62 + $0xb8] sm:%s54] %v155
        %v157 = vld [vmem:[%s61 + $0xbc] sm:%s54]
        %158 = vst [vmem:[%s62 + $0xbc] sm:%s54] %v157
        %v159 = vld [vmem:[%s61 + $0xc0] sm:%s54]
        %160 = vst [vmem:[%s62 + $0xc0] sm:%s54] %v159
        %v161 = vld [vmem:[%s61 + $0xe0] sm:%s54]
        %162 = vst [vmem:[%s62 + $0xc4] sm:%s54] %v161
        %v163 = vld [vmem:[%s61 + $0xc4] sm:%s54]
        %164 = vst [vmem:[%s62 + $0xc8] sm:%s54] %v163
        %v165 = vld [vmem:[%s61 + $0xe4] sm:%s54]
        %166 = vst [vmem:[%s62 + $0xcc] sm:%s54] %v165
        %v167 = vld [vmem:[%s61 + $0xc8] sm:%s54]
        %168 = vst [vmem:[%s62 + $0xd0] sm:%s54] %v167
        %v169 = vld [vmem:[%s61 + $0xe8] sm:%s54]
        %170 = vst [vmem:[%s62 + $0xd4] sm:%s54] %v169
        %v171 = vld [vmem:[%s61 + $0xcc] sm:%s54]
        %172 = vst [vmem:[%s62 + $0xd8] sm:%s54] %v171
        %v173 = vld [vmem:[%s61 + $0xec] sm:%s54]
        %174 = vst [vmem:[%s62 + $0xdc] sm:%s54] %v173
        %v175 = vld [vmem:[%s61 + $0xd0] sm:%s54]
        %176 = vst [vmem:[%s62 + $0xe0] sm:%s54] %v175
        %v177 = vld [vmem:[%s61 + $0xf0] sm:%s54]
        %178 = vst [vmem:[%s62 + $0xe4] sm:%s54] %v177
        %v179 = vld [vmem:[%s61 + $0xd4] sm:%s54]
        %180 = vst [vmem:[%s62 + $0xe8] sm:%s54] %v179
        %v181 = vld [vmem:[%s61 + $0xf4] sm:%s54]
        %182 = vst [vmem:[%s62 + $0xec] sm:%s54] %v181
        %v183 = vld [vmem:[%s61 + $0xd8] sm:%s54]
        %184 = vst [vmem:[%s62 + $0xf0] sm:%s54] %v183
        %v185 = vld [vmem:[%s61 + $0xf8] sm:%s54]
        %186 = vst [vmem:[%s62 + $0xf4] sm:%s54] %v185
        %v187 = vld [vmem:[%s61 + $0xdc] sm:%s54]
        %188 = vst [vmem:[%s62 + $0xf8] sm:%s54] %v187
        %v189 = vld [vmem:[%s61 + $0xfc] sm:%s54]
        %190 = vst [vmem:[%s62 + $0xfc] sm:%s54] %v189
      $region62: #{dueling_cnn_dqn_forward.1} parent=56 // loop_footer
        %s60 = sadd.s32 1, %s56
      $region63: #{dueling_cnn_dqn_forward.1} parent=56 // loop_footer_branch
        %55 = sbr.rel target = $region59
      $region64: #{dueling_cnn_dqn_forward.1} parent=56 // loop_exit
        _
    $region57: #{dueling_cnn_dqn_forward.1} parent=1 // pred_fallthru
      _
    // Predicated region
    $region83: #{dueling_cnn_dqn_forward.1} parent=1 // pred_check
      _
    $region84: #{dueling_cnn_dqn_forward.1} parent=1 // pred_check_branch
      %348 = sbr.rel (0) target = $region86
    $region85: #{dueling_cnn_dqn_forward.1} parent=1 // pred_region
      %349 = vsyncadd [#allocation3], 4096
    $region86: #{dueling_cnn_dqn_forward.1} parent=1 // pred_fallthru
      _
    %v350 = vld [vmem:[%s0] sm:$0xff]
    %v351 = vld [vmem:[%s0 + $0x8] sm:$0xff]
    %v352 = vld [vmem:[%s0 + $0x10] sm:$0xff]
    %v353 = vld [vmem:[%s0 + $0x18] sm:$0xff]
    %v354 = vld [vmem:[%s0 + $0x20] sm:$0xff]
    %v355 = vld [vmem:[%s0 + $0x28] sm:$0xff]
    %v356 = vld [vmem:[%s0 + $0x30] sm:$0xff]
    %v357 = vld [vmem:[%s0 + $0x38] sm:$0xff]
    %v358 = vld [vmem:[%s0 + $0x40] sm:$0xff]
    %v359 = vld [vmem:[%s0 + $0x48] sm:$0xff]
    %v360 = vld [vmem:[%s0 + $0x50] sm:$0xff]
    %v361 = vld [vmem:[%s0 + $0x58] sm:$0xff]
    %v362 = vld [vmem:[%s0 + $0x60] sm:$0xff]
    %v363 = vld [vmem:[%s0 + $0x68] sm:$0xff]
    %v364 = vld [vmem:[%s0 + $0x70] sm:$0xff]
    %v365 = vld [vmem:[%s0 + $0x78] sm:$0xff]
    %v366 = vld [vmem:[%s0 + $0x80] sm:$0xff]
    %v367 = vld [vmem:[%s0 + $0x88] sm:$0xff]
    %v368 = vld [vmem:[%s0 + $0x90] sm:$0xff]
    %v369 = vld [vmem:[%s0 + $0x98] sm:$0xff]
    %v370 = vld [vmem:[%s0 + $0xa0] sm:$0xff]
    %v371 = vld [vmem:[%s0 + $0xa8] sm:$0xff]
    %v372 = vld [vmem:[%s0 + $0xb0] sm:$0xff]
    %v373 = vld [vmem:[%s0 + $0xb8] sm:$0xff]
    %v374 = vld [vmem:[%s0 + $0xc0] sm:$0xff]
    %v375 = vld [vmem:[%s0 + $0xc8] sm:$0xff]
    %v376 = vld [vmem:[%s0 + $0xd0] sm:$0xff]
    %v377 = vld [vmem:[%s0 + $0xd8] sm:$0xff]
    %v378 = vld [vmem:[%s0 + $0xe0] sm:$0xff]
    %v379 = vld [vmem:[%s0 + $0xe8] sm:$0xff]
    %v380 = vld [vmem:[%s0 + $0xf0] sm:$0xff]
    %v381 = vld [vmem:[%s0 + $0xf8] sm:$0xff]
    %v382 = vld [vmem:[%s0 + $0x100] sm:$0xff]
    %v383 = vld [vmem:[%s0 + $0x108] sm:$0xff]
    %v384 = vld [vmem:[%s0 + $0x110] sm:$0xff]
    %v385 = vld [vmem:[%s0 + $0x118] sm:$0xff]
    %v386 = vld [vmem:[%s1] sm:$0xf]
    %v387 = vld [vmem:[%s1 + $0x4] sm:$0xf]
    %v388 = vld [vmem:[%s1 + $0x8] sm:$0xf]
    %v389 = vld [vmem:[%s1 + $0xc] sm:$0xf]
    %v390 = vld [vmem:[%s1 + $0x10] sm:$0xf]
    %v391 = vld [vmem:[%s1 + $0x14] sm:$0xf]
    %v392 = vld [vmem:[%s1 + $0x18] sm:$0xf]
    %v393 = vld [vmem:[%s1 + $0x1c] sm:$0xf]
    %v394 = vld [vmem:[%s1 + $0x20] sm:$0xf]
    %v395 = vld [vmem:[%s1 + $0x24] sm:$0xf]
    %v396 = vld [vmem:[%s1 + $0x28] sm:$0xf]
    %v397 = vld [vmem:[%s1 + $0x2c] sm:$0xf]
    %v398 = vld [vmem:[%s1 + $0x30] sm:$0xf]
    %v399 = vld [vmem:[%s1 + $0x34] sm:$0xf]
    %v400 = vld [vmem:[%s1 + $0x38] sm:$0xf]
    %v401 = vld [vmem:[%s1 + $0x3c] sm:$0xf]
    %v402 = vld [vmem:[%s1 + $0x40] sm:$0xf]
    %v403 = vld [vmem:[%s1 + $0x44] sm:$0xf]
    %v404 = vld [vmem:[%s1 + $0x48] sm:$0xf]
    %v405 = vld [vmem:[%s1 + $0x4c] sm:$0xf]
    %v406 = vld [vmem:[%s1 + $0x50] sm:$0xf]
    %v407 = vld [vmem:[%s1 + $0x54] sm:$0xf]
    %v408 = vld [vmem:[%s1 + $0x58] sm:$0xf]
    %v409 = vld [vmem:[%s1 + $0x5c] sm:$0xf]
    %v410 = vld [vmem:[%s1 + $0x60] sm:$0xf]
    %v411 = vld [vmem:[%s1 + $0x64] sm:$0xf]
    %v412 = vld [vmem:[%s1 + $0x68] sm:$0xf]
    %v413 = vld [vmem:[%s1 + $0x6c] sm:$0xf]
    %v414 = vld [vmem:[%s1 + $0x70] sm:$0xf]
    %v415 = vld [vmem:[%s1 + $0x74] sm:$0xf]
    %v416 = vld [vmem:[%s1 + $0x78] sm:$0xf]
    %v417 = vld [vmem:[%s1 + $0x7c] sm:$0xf]
    %v418 = vld [vmem:[%s2] sm:$0x1]
    %v420 = vlaneseq
    %v421 = vshrl.u32 %v420, 7
    %v422 = vsub.s32 0, %v421
    %v423 = vrot.slane %v418, %v422
    %v461 = vunpack.c.l.b16 %v350
    %v462 = vunpack.c.h.b16 %v350
    %v463 = vunpack.c.l.b16 %v351
    %v464 = vunpack.c.h.b16 %v351
    %v465 = vunpack.c.l.b16 %v352
    %v466 = vunpack.c.h.b16 %v352
    %v467 = vunpack.c.l.b16 %v353
    %v468 = vunpack.c.h.b16 %v353
    %v469 = vunpack.c.l.b16 %v354
    %v470 = vunpack.c.h.b16 %v354
    %v471 = vunpack.c.l.b16 %v355
    %v472 = vunpack.c.h.b16 %v355
    %v473 = vunpack.c.l.b16 %v356
    %v474 = vunpack.c.h.b16 %v356
    %v475 = vunpack.c.l.b16 %v357
    %v476 = vunpack.c.h.b16 %v357
    %v477 = vunpack.c.l.b16 %v358
    %v478 = vunpack.c.h.b16 %v358
    %v479 = vunpack.c.l.b16 %v359
    %v480 = vunpack.c.h.b16 %v359
    %v481 = vunpack.c.l.b16 %v360
    %v482 = vunpack.c.h.b16 %v360
    %v483 = vunpack.c.l.b16 %v361
    %v484 = vunpack.c.h.b16 %v361
    %v485 = vunpack.c.l.b16 %v362
    %v486 = vunpack.c.h.b16 %v362
    %v487 = vunpack.c.l.b16 %v363
    %v488 = vunpack.c.h.b16 %v363
    %v489 = vunpack.c.l.b16 %v364
    %v490 = vunpack.c.h.b16 %v364
    %v491 = vunpack.c.l.b16 %v365
    %v492 = vunpack.c.h.b16 %v365
    %v493 = vunpack.c.l.b16 %v366
    %v494 = vunpack.c.h.b16 %v366
    %v495 = vunpack.c.l.b16 %v367
    %v496 = vunpack.c.h.b16 %v367
    %v497 = vunpack.c.l.b16 %v368
    %v498 = vunpack.c.h.b16 %v368
    %v499 = vunpack.c.l.b16 %v369
    %v500 = vunpack.c.h.b16 %v369
    %v501 = vunpack.c.l.b16 %v370
    %v502 = vunpack.c.h.b16 %v370
    %v503 = vunpack.c.l.b16 %v371
    %v504 = vunpack.c.h.b16 %v371
    %v505 = vunpack.c.l.b16 %v372
    %v506 = vunpack.c.h.b16 %v372
    %v507 = vunpack.c.l.b16 %v373
    %v508 = vunpack.c.h.b16 %v373
    %v509 = vunpack.c.l.b16 %v374
    %v510 = vunpack.c.h.b16 %v374
    %v511 = vunpack.c.l.b16 %v375
    %v512 = vunpack.c.h.b16 %v375
    %v513 = vunpack.c.l.b16 %v376
    %v514 = vunpack.c.h.b16 %v376
    %v515 = vunpack.c.l.b16 %v377
    %v516 = vunpack.c.h.b16 %v377
    %v517 = vunpack.c.l.b16 %v378
    %v518 = vunpack.c.h.b16 %v378
    %v519 = vunpack.c.l.b16 %v379
    %v520 = vunpack.c.h.b16 %v379
    %v521 = vunpack.c.l.b16 %v380
    %v522 = vunpack.c.h.b16 %v380
    %v523 = vunpack.c.l.b16 %v381
    %v524 = vunpack.c.h.b16 %v381
    %v525 = vunpack.c.l.b16 %v382
    %v526 = vunpack.c.h.b16 %v382
    %v527 = vunpack.c.l.b16 %v383
    %v528 = vunpack.c.h.b16 %v383
    %v529 = vunpack.c.l.b16 %v384
    %v530 = vunpack.c.h.b16 %v384
    %v531 = vunpack.c.l.b16 %v385
    %v532 = vunpack.c.h.b16 %v385
    %v533 = vpack.c.b16 %v463, %v461
    %v534 = vpack.c.b16 %v464, %v462
    %v535 = vpack.c.b16 %v467, %v465
    %v536 = vpack.c.b16 %v468, %v466
    %v537 = vpack.c.b16 %v471, %v469
    %v538 = vpack.c.b16 %v472, %v470
    %v539 = vpack.c.b16 %v475, %v473
    %v540 = vpack.c.b16 %v476, %v474
    %v541 = vpack.c.b16 %v479, %v477
    %v542 = vpack.c.b16 %v480, %v478
    %v543 = vpack.c.b16 %v483, %v481
    %v544 = vpack.c.b16 %v484, %v482
    %v545 = vpack.c.b16 %v487, %v485
    %v546 = vpack.c.b16 %v488, %v486
    %v547 = vpack.c.b16 %v491, %v489
    %v548 = vpack.c.b16 %v492, %v490
    %v549 = vpack.c.b16 %v495, %v493
    %v550 = vpack.c.b16 %v496, %v494
    %v551 = vpack.c.b16 %v499, %v497
    %v552 = vpack.c.b16 %v500, %v498
    %v553 = vpack.c.b16 %v503, %v501
    %v554 = vpack.c.b16 %v504, %v502
    %v555 = vpack.c.b16 %v507, %v505
    %v556 = vpack.c.b16 %v508, %v506
    %v557 = vpack.c.b16 %v511, %v509
    %v558 = vpack.c.b16 %v512, %v510
    %v559 = vpack.c.b16 %v515, %v513
    %v560 = vpack.c.b16 %v516, %v514
    %v561 = vpack.c.b16 %v519, %v517
    %v562 = vpack.c.b16 %v520, %v518
    %v563 = vpack.c.b16 %v523, %v521
    %v564 = vpack.c.b16 %v524, %v522
    %v565 = vpack.c.b16 %v527, %v525
    %v566 = vpack.c.b16 %v528, %v526
    %v567 = vpack.c.b16 %v531, %v529
    %v568 = vpack.c.b16 %v532, %v530
    %v637 = vunpack.c.l.b16 %v386
    %v638 = vunpack.c.l.b16 %v387
    %v639 = vunpack.c.l.b16 %v388
    %v640 = vunpack.c.l.b16 %v389
    %v641 = vunpack.c.l.b16 %v390
    %v642 = vunpack.c.l.b16 %v391
    %v643 = vunpack.c.l.b16 %v392
    %v644 = vunpack.c.l.b16 %v393
    %v645 = vunpack.c.l.b16 %v394
    %v646 = vunpack.c.l.b16 %v395
    %v647 = vunpack.c.l.b16 %v396
    %v648 = vunpack.c.l.b16 %v397
    %v649 = vunpack.c.l.b16 %v398
    %v650 = vunpack.c.l.b16 %v399
    %v651 = vunpack.c.l.b16 %v400
    %v652 = vunpack.c.l.b16 %v401
    %v653 = vunpack.c.l.b16 %v402
    %v654 = vunpack.c.l.b16 %v403
    %v655 = vunpack.c.l.b16 %v404
    %v656 = vunpack.c.l.b16 %v405
    %v657 = vunpack.c.l.b16 %v406
    %v658 = vunpack.c.l.b16 %v407
    %v659 = vunpack.c.l.b16 %v408
    %v660 = vunpack.c.l.b16 %v409
    %v661 = vunpack.c.l.b16 %v410
    %v662 = vunpack.c.l.b16 %v411
    %v663 = vunpack.c.l.b16 %v412
    %v664 = vunpack.c.l.b16 %v413
    %v665 = vunpack.c.l.b16 %v414
    %v666 = vunpack.c.l.b16 %v415
    %v667 = vunpack.c.l.b16 %v416
    %v668 = vunpack.c.l.b16 %v417
    %v669 = vpack.c.b16 %v638, %v637
    %v670 = vpack.c.b16 %v640, %v639
    %v671 = vpack.c.b16 %v642, %v641
    %v672 = vpack.c.b16 %v644, %v643
    %v673 = vpack.c.b16 %v646, %v645
    %v674 = vpack.c.b16 %v648, %v647
    %v675 = vpack.c.b16 %v650, %v649
    %v676 = vpack.c.b16 %v652, %v651
    %v677 = vpack.c.b16 %v654, %v653
    %v678 = vpack.c.b16 %v656, %v655
    %v679 = vpack.c.b16 %v658, %v657
    %v680 = vpack.c.b16 %v660, %v659
    %v681 = vpack.c.b16 %v662, %v661
    %v682 = vpack.c.b16 %v664, %v663
    %v683 = vpack.c.b16 %v666, %v665
    %v684 = vpack.c.b16 %v668, %v667
    %701 = vmatprep.subr.bf16.mxu0 0
    %702 = vmatpush1.bf16.msra.mxu0 %v669
    %703 = vmatprep.subr.bf16.mxu0 0
    %704 = vmatpush1.bf16.msra.mxu0 %v670
    %705 = vmatprep.subr.bf16.mxu0 0
    %706 = vmatpush1.bf16.msra.mxu0 %v671
    %707 = vmatprep.subr.bf16.mxu0 0
    %708 = vmatpush1.bf16.msra.mxu0 %v672
    %709 = vmatprep.subr.bf16.mxu0 0
    %710 = vmatpush1.bf16.msra.mxu0 %v673
    %711 = vmatprep.subr.bf16.mxu0 0
    %712 = vmatpush1.bf16.msra.mxu0 %v674
    %713 = vmatprep.subr.bf16.mxu0 0
    %714 = vmatpush1.bf16.msra.mxu0 %v675
    %715 = vmatprep.subr.bf16.mxu0 0
    %716 = vmatpush1.bf16.msra.mxu0 %v676
    %717 = vmatprep.subr.bf16.mxu0 0
    %718 = vmatpush1.bf16.msra.mxu0 %v677
    %719 = vmatprep.subr.bf16.mxu0 0
    %720 = vmatpush1.bf16.msra.mxu0 %v678
    %721 = vmatprep.subr.bf16.mxu0 0
    %722 = vmatpush1.bf16.msra.mxu0 %v679
    %723 = vmatprep.subr.bf16.mxu0 0
    %724 = vmatpush1.bf16.msra.mxu0 %v680
    %725 = vmatprep.subr.bf16.mxu0 0
    %726 = vmatpush1.bf16.msra.mxu0 %v681
    %727 = vmatprep.subr.bf16.mxu0 0
    %728 = vmatpush1.bf16.msra.mxu0 %v682
    %729 = vmatprep.subr.bf16.mxu0 0
    %730 = vmatpush1.bf16.msra.mxu0 %v683
    %731 = vmatprep.subr.bf16.mxu0 0
    %732 = vmatpush1.bf16.msra.mxu0 %v684
    %733 = vmatprep.mubr.bf16.mxu0 %v534
    %734 = vmatmul.mubr.bf16.gmra.mrb[0].mxu0 %v533
    %v735 = vpop.f32.mrb[0].mxu0
    %v736 = vadd.f32 %v423, %v735
    %v737 = vpop.f32.mrb[0].mxu0
    %v738 = vpop.f32.mrb[0].mxu0
    %v739 = vadd.f32 %v423, %v738
    %v740 = vpop.f32.mrb[0].mxu0
    %741 = vmatprep.mubr.bf16.mxu0 %v536
    %742 = vmatmul.mubr.bf16.gmra.mrb[0].mxu0 %v535
    %v743 = vpop.f32.mrb[0].mxu0
    %v744 = vadd.f32 %v423, %v743
    %v745 = vpop.f32.mrb[0].mxu0
    %v746 = vpop.f32.mrb[0].mxu0
    %v747 = vadd.f32 %v423, %v746
    %v748 = vpop.f32.mrb[0].mxu0
    %749 = vmatprep.mubr.bf16.mxu0 %v538
    %750 = vmatmul.mubr.bf16.gmra.mrb[0].mxu0 %v537
    %v751 = vpop.f32.mrb[0].mxu0
    %v752 = vadd.f32 %v423, %v751
    %v753 = vpop.f32.mrb[0].mxu0
    %v754 = vpop.f32.mrb[0].mxu0
    %v755 = vadd.f32 %v423, %v754
    %v756 = vpop.f32.mrb[0].mxu0
    %757 = vmatprep.mubr.bf16.mxu0 %v540
    %758 = vmatmul.mubr.bf16.gmra.mrb[0].mxu0 %v539
    %v759 = vpop.f32.mrb[0].mxu0
    %v760 = vadd.f32 %v423, %v759
    %v761 = vpop.f32.mrb[0].mxu0
    %v762 = vpop.f32.mrb[0].mxu0
    %v763 = vadd.f32 %v423, %v762
    %v764 = vpop.f32.mrb[0].mxu0
    %765 = vmatprep.mubr.bf16.mxu0 %v542
    %766 = vmatmul.mubr.bf16.gmra.mrb[0].mxu0 %v541
    %v767 = vpop.f32.mrb[0].mxu0
    %v768 = vadd.f32 %v423, %v767
    %v769 = vpop.f32.mrb[0].mxu0
    %v770 = vpop.f32.mrb[0].mxu0
    %v771 = vadd.f32 %v423, %v770
    %v772 = vpop.f32.mrb[0].mxu0
    %773 = vmatprep.mubr.bf16.mxu0 %v544
    %774 = vmatmul.mubr.bf16.gmra.mrb[0].mxu0 %v543
    %v775 = vpop.f32.mrb[0].mxu0
    %v776 = vadd.f32 %v423, %v775
    %v777 = vpop.f32.mrb[0].mxu0
    %v778 = vpop.f32.mrb[0].mxu0
    %v779 = vadd.f32 %v423, %v778
    %v780 = vpop.f32.mrb[0].mxu0
    %781 = vmatprep.mubr.bf16.mxu0 %v546
    %782 = vmatmul.mubr.bf16.gmra.mrb[0].mxu0 %v545
    %v783 = vpop.f32.mrb[0].mxu0
    %v784 = vadd.f32 %v423, %v783
    %v785 = vpop.f32.mrb[0].mxu0
    %v786 = vpop.f32.mrb[0].mxu0
    %v787 = vadd.f32 %v423, %v786
    %v788 = vpop.f32.mrb[0].mxu0
    %789 = vmatprep.mubr.bf16.mxu0 %v548
    %790 = vmatmul.mubr.bf16.gmra.mrb[0].mxu0 %v547
    %v791 = vpop.f32.mrb[0].mxu0
    %v792 = vadd.f32 %v423, %v791
    %v793 = vpop.f32.mrb[0].mxu0
    %v794 = vpop.f32.mrb[0].mxu0
    %v795 = vadd.f32 %v423, %v794
    %v796 = vpop.f32.mrb[0].mxu0
    %797 = vmatprep.mubr.bf16.mxu0 %v550
    %798 = vmatmul.mubr.bf16.gmra.mrb[0].mxu0 %v549
    %v799 = vpop.f32.mrb[0].mxu0
    %v800 = vadd.f32 %v423, %v799
    %v801 = vpop.f32.mrb[0].mxu0
    %v802 = vpop.f32.mrb[0].mxu0
    %v803 = vadd.f32 %v423, %v802
    %v804 = vpop.f32.mrb[0].mxu0
    %805 = vmatprep.mubr.bf16.mxu0 %v552
    %806 = vmatmul.mubr.bf16.gmra.mrb[0].mxu0 %v551
    %v807 = vpop.f32.mrb[0].mxu0
    %v808 = vadd.f32 %v423, %v807
    %v809 = vpop.f32.mrb[0].mxu0
    %v810 = vpop.f32.mrb[0].mxu0
    %v811 = vadd.f32 %v423, %v810
    %v812 = vpop.f32.mrb[0].mxu0
    %813 = vmatprep.mubr.bf16.mxu0 %v554
    %814 = vmatmul.mubr.bf16.gmra.mrb[0].mxu0 %v553
    %v815 = vpop.f32.mrb[0].mxu0
    %v816 = vadd.f32 %v423, %v815
    %v817 = vpop.f32.mrb[0].mxu0
    %v818 = vpop.f32.mrb[0].mxu0
    %v819 = vadd.f32 %v423, %v818
    %v820 = vpop.f32.mrb[0].mxu0
    %821 = vmatprep.mubr.bf16.mxu0 %v556
    %822 = vmatmul.mubr.bf16.gmra.mrb[0].mxu0 %v555
    %v823 = vpop.f32.mrb[0].mxu0
    %v824 = vadd.f32 %v423, %v823
    %v825 = vpop.f32.mrb[0].mxu0
    %v826 = vpop.f32.mrb[0].mxu0
    %v827 = vadd.f32 %v423, %v826
    %v828 = vpop.f32.mrb[0].mxu0
    %829 = vmatprep.mubr.bf16.mxu0 %v558
    %830 = vmatmul.mubr.bf16.gmra.mrb[0].mxu0 %v557
    %v831 = vpop.f32.mrb[0].mxu0
    %v832 = vadd.f32 %v423, %v831
    %v833 = vpop.f32.mrb[0].mxu0
    %v834 = vpop.f32.mrb[0].mxu0
    %v835 = vadd.f32 %v423, %v834
    %v836 = vpop.f32.mrb[0].mxu0
    %837 = vmatprep.mubr.bf16.mxu0 %v560
    %838 = vmatmul.mubr.bf16.gmra.mrb[0].mxu0 %v559
    %v839 = vpop.f32.mrb[0].mxu0
    %v840 = vadd.f32 %v423, %v839
    %v841 = vpop.f32.mrb[0].mxu0
    %v842 = vpop.f32.mrb[0].mxu0
    %v843 = vadd.f32 %v423, %v842
    %v844 = vpop.f32.mrb[0].mxu0
    %845 = vmatprep.mubr.bf16.mxu0 %v562
    %846 = vmatmul.mubr.bf16.gmra.mrb[0].mxu0 %v561
    %v847 = vpop.f32.mrb[0].mxu0
    %v848 = vadd.f32 %v423, %v847
    %v849 = vpop.f32.mrb[0].mxu0
    %v850 = vpop.f32.mrb[0].mxu0
    %v851 = vadd.f32 %v423, %v850
    %v852 = vpop.f32.mrb[0].mxu0
    %853 = vmatprep.mubr.bf16.mxu0 %v564
    %854 = vmatmul.mubr.bf16.gmra.mrb[0].mxu0 %v563
    %v855 = vpop.f32.mrb[0].mxu0
    %v856 = vadd.f32 %v423, %v855
    %v857 = vpop.f32.mrb[0].mxu0
    %v858 = vpop.f32.mrb[0].mxu0
    %v859 = vadd.f32 %v423, %v858
    %v860 = vpop.f32.mrb[0].mxu0
    %861 = vmatprep.mubr.bf16.mxu0 %v566
    %862 = vmatmul.mubr.bf16.gmra.mrb[0].mxu0 %v565
    %v863 = vpop.f32.mrb[0].mxu0
    %v864 = vadd.f32 %v423, %v863
    %v865 = vpop.f32.mrb[0].mxu0
    %v866 = vpop.f32.mrb[0].mxu0
    %v867 = vadd.f32 %v423, %v866
    %v868 = vpop.f32.mrb[0].mxu0
    %869 = vmatprep.mubr.bf16.mxu0 %v568
    %870 = vmatmul.mubr.bf16.gmra.mrb[0].mxu0 %v567
    %v871 = vpop.f32.mrb[0].mxu0
    %v872 = vadd.f32 %v423, %v871
    %v873 = vpop.f32.mrb[0].mxu0
    %v874 = vpop.f32.mrb[0].mxu0
    %v875 = vadd.f32 %v423, %v874
    %v876 = vpop.f32.mrb[0].mxu0
    %877 = vdwg.mxu0
    %v878 = vmax.f32 %v736, 0.0
    %v879 = vmax.f32 %v739, 0.0
    %v880 = vmax.f32 %v744, 0.0
    %v881 = vmax.f32 %v747, 0.0
    %v882 = vmax.f32 %v752, 0.0
    %v883 = vmax.f32 %v755, 0.0
    %v884 = vmax.f32 %v760, 0.0
    %v885 = vmax.f32 %v763, 0.0
    %v886 = vmax.f32 %v768, 0.0
    %v887 = vmax.f32 %v771, 0.0
    %v888 = vmax.f32 %v776, 0.0
    %v889 = vmax.f32 %v779, 0.0
    %v890 = vmax.f32 %v784, 0.0
    %v891 = vmax.f32 %v787, 0.0
    %v892 = vmax.f32 %v792, 0.0
    %v893 = vmax.f32 %v795, 0.0
    %v894 = vmax.f32 %v800, 0.0
    %v895 = vmax.f32 %v803, 0.0
    %v896 = vmax.f32 %v808, 0.0
    %v897 = vmax.f32 %v811, 0.0
    %v898 = vmax.f32 %v816, 0.0
    %v899 = vmax.f32 %v819, 0.0
    %v900 = vmax.f32 %v824, 0.0
    %v901 = vmax.f32 %v827, 0.0
    %v902 = vmax.f32 %v832, 0.0
    %v903 = vmax.f32 %v835, 0.0
    %v904 = vmax.f32 %v840, 0.0
    %v905 = vmax.f32 %v843, 0.0
    %v906 = vmax.f32 %v848, 0.0
    %v907 = vmax.f32 %v851, 0.0
    %v908 = vmax.f32 %v856, 0.0
    %v909 = vmax.f32 %v859, 0.0
    %v910 = vmax.f32 %v864, 0.0
    %v911 = vmax.f32 %v867, 0.0
    %v912 = vmax.f32 %v872, 0.0
    %v913 = vmax.f32 %v875, 0.0
    %vm917 = vcmask 1045504
    %v918 = vrot.slane %v880, 2
    %v919 = vrot.slane %v881, 2
    %v920 = vsel %vm917, %v918, %v919
    %v921 = vrot.slane %v882, 2
    %v922 = vsel %vm917, %v919, %v921
    %923 = vrot.lane.b32.xlu0 %v920, 32
    %v924 = vpop.permute.xlu0 %923
    %925 = vrot.lane.b32.xlu0 %v922, 32
    %v926 = vpop.permute.xlu0 %925
    %927 = vrot.lane.b32.xlu0 %v921, 32
    %v928 = vpop.permute.xlu0 %927
    %vm934 = vcmask 1043456
    %v935 = vrot.slane %v882, 4
    %v936 = vrot.slane %v883, 4
    %v937 = vsel %vm934, %v935, %v936
    %v938 = vrot.slane %v884, 4
    %v939 = vsel %vm934, %v936, %v938
    %940 = vrot.lane.b32.xlu0 %v937, 64
    %v941 = vpop.permute.xlu0 %940
    %942 = vrot.lane.b32.xlu0 %v939, 64
    %v943 = vpop.permute.xlu0 %942
    %944 = vrot.lane.b32.xlu0 %v938, 64
    %v945 = vpop.permute.xlu0 %944
    %vm951 = vcmask 1041408
    %v952 = vrot.slane %v884, 6
    %v953 = vrot.slane %v885, 6
    %v954 = vsel %vm951, %v952, %v953
    %v955 = vrot.slane %v886, 6
    %v956 = vsel %vm951, %v953, %v955
    %957 = vrot.lane.b32.xlu0 %v954, 96
    %v958 = vpop.permute.xlu0 %957
    %959 = vrot.lane.b32.xlu0 %v956, 96
    %v960 = vpop.permute.xlu0 %959
    %961 = vrot.lane.b32.xlu0 %v955, 96
    %v962 = vpop.permute.xlu0 %961
    %v969 = vrot.slane %v889, 2
    %v970 = vrot.slane %v890, 2
    %v971 = vsel %vm917, %v969, %v970
    %v972 = vrot.slane %v891, 2
    %v973 = vsel %vm917, %v970, %v972
    %974 = vrot.lane.b32.xlu0 %v971, 32
    %v975 = vpop.permute.xlu0 %974
    %976 = vrot.lane.b32.xlu0 %v973, 32
    %v977 = vpop.permute.xlu0 %976
    %978 = vrot.lane.b32.xlu0 %v972, 32
    %v979 = vpop.permute.xlu0 %978
    %v985 = vrot.slane %v891, 4
    %v986 = vrot.slane %v892, 4
    %v987 = vsel %vm934, %v985, %v986
    %v988 = vrot.slane %v893, 4
    %v989 = vsel %vm934, %v986, %v988
    %990 = vrot.lane.b32.xlu0 %v987, 64
    %v991 = vpop.permute.xlu0 %990
    %992 = vrot.lane.b32.xlu0 %v989, 64
    %v993 = vpop.permute.xlu0 %992
    %994 = vrot.lane.b32.xlu0 %v988, 64
    %v995 = vpop.permute.xlu0 %994
    %v1001 = vrot.slane %v893, 6
    %v1002 = vrot.slane %v894, 6
    %v1003 = vsel %vm951, %v1001, %v1002
    %v1004 = vrot.slane %v895, 6
    %v1005 = vsel %vm951, %v1002, %v1004
    %1006 = vrot.lane.b32.xlu0 %v1003, 96
    %v1007 = vpop.permute.xlu0 %1006
    %1008 = vrot.lane.b32.xlu0 %v1005, 96
    %v1009 = vpop.permute.xlu0 %1008
    %1010 = vrot.lane.b32.xlu0 %v1004, 96
    %v1011 = vpop.permute.xlu0 %1010
    %v1018 = vrot.slane %v898, 2
    %v1019 = vrot.slane %v899, 2
    %v1020 = vsel %vm917, %v1018, %v1019
    %v1021 = vrot.slane %v900, 2
    %v1022 = vsel %vm917, %v1019, %v1021
    %1023 = vrot.lane.b32.xlu0 %v1020, 32
    %v1024 = vpop.permute.xlu0 %1023
    %1025 = vrot.lane.b32.xlu0 %v1022, 32
    %v1026 = vpop.permute.xlu0 %1025
    %1027 = vrot.lane.b32.xlu0 %v1021, 32
    %v1028 = vpop.permute.xlu0 %1027
    %v1034 = vrot.slane %v900, 4
    %v1035 = vrot.slane %v901, 4
    %v1036 = vsel %vm934, %v1034, %v1035
    %v1037 = vrot.slane %v902, 4
    %v1038 = vsel %vm934, %v1035, %v1037
    %1039 = vrot.lane.b32.xlu0 %v1036, 64
    %v1040 = vpop.permute.xlu0 %1039
    %1041 = vrot.lane.b32.xlu0 %v1038, 64
    %v1042 = vpop.permute.xlu0 %1041
    %1043 = vrot.lane.b32.xlu0 %v1037, 64
    %v1044 = vpop.permute.xlu0 %1043
    %v1050 = vrot.slane %v902, 6
    %v1051 = vrot.slane %v903, 6
    %v1052 = vsel %vm951, %v1050, %v1051
    %v1053 = vrot.slane %v904, 6
    %v1054 = vsel %vm951, %v1051, %v1053
    %1055 = vrot.lane.b32.xlu0 %v1052, 96
    %v1056 = vpop.permute.xlu0 %1055
    %1057 = vrot.lane.b32.xlu0 %v1054, 96
    %v1058 = vpop.permute.xlu0 %1057
    %1059 = vrot.lane.b32.xlu0 %v1053, 96
    %v1060 = vpop.permute.xlu0 %1059
    %v1067 = vrot.slane %v907, 2
    %v1068 = vrot.slane %v908, 2
    %v1069 = vsel %vm917, %v1067, %v1068
    %v1070 = vrot.slane %v909, 2
    %v1071 = vsel %vm917, %v1068, %v1070
    %1072 = vrot.lane.b32.xlu0 %v1069, 32
    %v1073 = vpop.permute.xlu0 %1072
    %1074 = vrot.lane.b32.xlu0 %v1071, 32
    %v1075 = vpop.permute.xlu0 %1074
    %1076 = vrot.lane.b32.xlu0 %v1070, 32
    %v1077 = vpop.permute.xlu0 %1076
    %v1083 = vrot.slane %v909, 4
    %v1084 = vrot.slane %v910, 4
    %v1085 = vsel %vm934, %v1083, %v1084
    %v1086 = vrot.slane %v911, 4
    %v1087 = vsel %vm934, %v1084, %v1086
    %1088 = vrot.lane.b32.xlu0 %v1085, 64
    %v1089 = vpop.permute.xlu0 %1088
    %1090 = vrot.lane.b32.xlu0 %v1087, 64
    %v1091 = vpop.permute.xlu0 %1090
    %1092 = vrot.lane.b32.xlu0 %v1086, 64
    %v1093 = vpop.permute.xlu0 %1092
    %v1099 = vrot.slane %v911, 6
    %v1100 = vrot.slane %v912, 6
    %v1101 = vsel %vm951, %v1099, %v1100
    %v1102 = vrot.slane %v913, 6
    %v1103 = vsel %vm951, %v1100, %v1102
    %1104 = vrot.lane.b32.xlu0 %v1101, 96
    %v1105 = vpop.permute.xlu0 %1104
    %1106 = vrot.lane.b32.xlu0 %v1103, 96
    %v1107 = vpop.permute.xlu0 %1106
    %1108 = vrot.lane.b32.xlu0 %v1102, 96
    %v1109 = vpop.permute.xlu0 %1108
    %vm1113 = vcmask 261120
    %v1114 = vsel %vm1113, %v878, %v924
    %v1115 = vsel %vm1113, %v879, %v926
    %v1116 = vsel %vm1113, %v880, %v928
    %vm1117 = vcmask 523264
    %v1118 = vsel %vm1117, %v1114, %v941
    %v1119 = vsel %vm1117, %v1115, %v943
    %v1120 = vsel %vm1117, %v1116, %v945
    %vm1121 = vcmask 785408
    %v1122 = vsel %vm1121, %v1118, %v958
    %v1123 = vsel %vm1121, %v1119, %v960
    %v1124 = vsel %vm1121, %v1120, %v962
    %v1125 = vsel %vm1113, %v887, %v975
    %v1126 = vsel %vm1113, %v888, %v977
    %v1127 = vsel %vm1113, %v889, %v979
    %v1128 = vsel %vm1117, %v1125, %v991
    %v1129 = vsel %vm1117, %v1126, %v993
    %v1130 = vsel %vm1117, %v1127, %v995
    %v1131 = vsel %vm1121, %v1128, %v1007
    %v1132 = vsel %vm1121, %v1129, %v1009
    %v1133 = vsel %vm1121, %v1130, %v1011
    %v1134 = vsel %vm1113, %v896, %v1024
    %v1135 = vsel %vm1113, %v897, %v1026
    %v1136 = vsel %vm1113, %v898, %v1028
    %v1137 = vsel %vm1117, %v1134, %v1040
    %v1138 = vsel %vm1117, %v1135, %v1042
    %v1139 = vsel %vm1117, %v1136, %v1044
    %v1140 = vsel %vm1121, %v1137, %v1056
    %v1141 = vsel %vm1121, %v1138, %v1058
    %v1142 = vsel %vm1121, %v1139, %v1060
    %v1143 = vsel %vm1113, %v905, %v1073
    %v1144 = vsel %vm1113, %v906, %v1075
    %v1145 = vsel %vm1113, %v907, %v1077
    %v1146 = vsel %vm1117, %v1143, %v1089
    %v1147 = vsel %vm1117, %v1144, %v1091
    %v1148 = vsel %vm1117, %v1145, %v1093
    %v1149 = vsel %vm1121, %v1146, %v1105
    %v1150 = vsel %vm1121, %v1147, %v1107
    %v1151 = vsel %vm1121, %v1148, %v1109
    %v1152 = vpack.c.bf16 %v1123, %v1122
    %v1153 = vpack.c.bf16 %v1132, %v1131
    %v1154 = vpack.c.bf16 %v1141, %v1140
    %v1155 = vpack.c.bf16 %v1150, %v1149
    %v1156 = vpack.c.bf16 %v1124, %v1124
    %v1157 = vpack.c.bf16 %v1133, %v1133
    %v1158 = vpack.c.bf16 %v1142, %v1142
    %v1159 = vpack.c.bf16 %v1151, %v1151
    %v1160 = vld [vmem:[%s3] sm:$0xf]
    %v1161 = vld [vmem:[%s3 + $0x4] sm:$0xf]
    %v1162 = vld [vmem:[%s3 + $0x8] sm:$0xf]
    %v1163 = vld [vmem:[%s3 + $0xc] sm:$0xf]
    %v1164 = vld [vmem:[%s3 + $0x10] sm:$0xf]
    %v1165 = vld [vmem:[%s3 + $0x14] sm:$0xf]
    %v1166 = vld [vmem:[%s3 + $0x18] sm:$0xf]
    %v1167 = vld [vmem:[%s3 + $0x1c] sm:$0xf]
    %v1168 = vld [vmem:[%s3 + $0x20] sm:$0xf]
    %v1169 = vld [vmem:[%s3 + $0x24] sm:$0xf]
    %v1170 = vld [vmem:[%s3 + $0x28] sm:$0xf]
    %v1171 = vld [vmem:[%s3 + $0x2c] sm:$0xf]
    %v1172 = vld [vmem:[%s3 + $0x30] sm:$0xf]
    %v1173 = vld [vmem:[%s3 + $0x34] sm:$0xf]
    %v1174 = vld [vmem:[%s3 + $0x38] sm:$0xf]
    %v1175 = vld [vmem:[%s3 + $0x3c] sm:$0xf]
    %v1176 = vld [vmem:[%s3 + $0x40] sm:$0xf]
    %v1177 = vld [vmem:[%s3 + $0x44] sm:$0xf]
    %v1178 = vld [vmem:[%s3 + $0x48] sm:$0xf]
    %v1179 = vld [vmem:[%s3 + $0x4c] sm:$0xf]
    %v1180 = vld [vmem:[%s3 + $0x50] sm:$0xf]
    %v1181 = vld [vmem:[%s3 + $0x54] sm:$0xf]
    %v1182 = vld [vmem:[%s3 + $0x58] sm:$0xf]
    %v1183 = vld [vmem:[%s3 + $0x5c] sm:$0xf]
    %v1184 = vld [vmem:[%s3 + $0x60] sm:$0xf]
    %v1185 = vld [vmem:[%s3 + $0x64] sm:$0xf]
    %v1186 = vld [vmem:[%s3 + $0x68] sm:$0xf]
    %v1187 = vld [vmem:[%s3 + $0x6c] sm:$0xf]
    %v1188 = vld [vmem:[%s3 + $0x70] sm:$0xf]
    %v1189 = vld [vmem:[%s3 + $0x74] sm:$0xf]
    %v1190 = vld [vmem:[%s3 + $0x78] sm:$0xf]
    %v1191 = vld [vmem:[%s3 + $0x7c] sm:$0xf]
    %v1192 = vld [vmem:[%s3 + $0x80] sm:$0xf]
    %v1193 = vld [vmem:[%s3 + $0x84] sm:$0xf]
    %v1194 = vld [vmem:[%s3 + $0x88] sm:$0xf]
    %v1195 = vld [vmem:[%s3 + $0x8c] sm:$0xf]
    %v1196 = vld [vmem:[%s3 + $0x90] sm:$0xf]
    %v1197 = vld [vmem:[%s3 + $0x94] sm:$0xf]
    %v1198 = vld [vmem:[%s3 + $0x98] sm:$0xf]
    %v1199 = vld [vmem:[%s3 + $0x9c] sm:$0xf]
    %v1200 = vld [vmem:[%s3 + $0xa0] sm:$0xf]
    %v1201 = vld [vmem:[%s3 + $0xa4] sm:$0xf]
    %v1202 = vld [vmem:[%s3 + $0xa8] sm:$0xf]
    %v1203 = vld [vmem:[%s3 + $0xac] sm:$0xf]
    %v1204 = vld [vmem:[%s3 + $0xb0] sm:$0xf]
    %v1205 = vld [vmem:[%s3 + $0xb4] sm:$0xf]
    %v1206 = vld [vmem:[%s3 + $0xb8] sm:$0xf]
    %v1207 = vld [vmem:[%s3 + $0xbc] sm:$0xf]
    %v1208 = vld [vmem:[%s3 + $0xc0] sm:$0xf]
    %v1209 = vld [vmem:[%s3 + $0xc4] sm:$0xf]
    %v1210 = vld [vmem:[%s3 + $0xc8] sm:$0xf]
    %v1211 = vld [vmem:[%s3 + $0xcc] sm:$0xf]
    %v1212 = vld [vmem:[%s3 + $0xd0] sm:$0xf]
    %v1213 = vld [vmem:[%s3 + $0xd4] sm:$0xf]
    %v1214 = vld [vmem:[%s3 + $0xd8] sm:$0xf]
    %v1215 = vld [vmem:[%s3 + $0xdc] sm:$0xf]
    %v1216 = vld [vmem:[%s3 + $0xe0] sm:$0xf]
    %v1217 = vld [vmem:[%s3 + $0xe4] sm:$0xf]
    %v1218 = vld [vmem:[%s3 + $0xe8] sm:$0xf]
    %v1219 = vld [vmem:[%s3 + $0xec] sm:$0xf]
    %v1220 = vld [vmem:[%s3 + $0xf0] sm:$0xf]
    %v1221 = vld [vmem:[%s3 + $0xf4] sm:$0xf]
    %v1222 = vld [vmem:[%s3 + $0xf8] sm:$0xf]
    %v1223 = vld [vmem:[%s3 + $0xfc] sm:$0xf]
    %v1224 = vld [vmem:[%s4] sm:$0x1]
    %v1226 = vlaneseq
    %v1227 = vshrl.u32 %v1226, 7
    %v1228 = vsub.s32 0, %v1227
    %v1229 = vrot.slane %v1224, %v1228
    %v1295 = vunpack.c.l.b16 %v1160
    %v1296 = vunpack.c.l.b16 %v1161
    %v1297 = vunpack.c.l.b16 %v1162
    %v1298 = vunpack.c.l.b16 %v1163
    %v1299 = vunpack.c.l.b16 %v1164
    %v1300 = vunpack.c.l.b16 %v1165
    %v1301 = vunpack.c.l.b16 %v1166
    %v1302 = vunpack.c.l.b16 %v1167
    %v1303 = vunpack.c.l.b16 %v1168
    %v1304 = vunpack.c.l.b16 %v1169
    %v1305 = vunpack.c.l.b16 %v1170
    %v1306 = vunpack.c.l.b16 %v1171
    %v1307 = vunpack.c.l.b16 %v1172
    %v1308 = vunpack.c.l.b16 %v1173
    %v1309 = vunpack.c.l.b16 %v1174
    %v1310 = vunpack.c.l.b16 %v1175
    %v1311 = vunpack.c.l.b16 %v1176
    %v1312 = vunpack.c.l.b16 %v1177
    %v1313 = vunpack.c.l.b16 %v1178
    %v1314 = vunpack.c.l.b16 %v1179
    %v1315 = vunpack.c.l.b16 %v1180
    %v1316 = vunpack.c.l.b16 %v1181
    %v1317 = vunpack.c.l.b16 %v1182
    %v1318 = vunpack.c.l.b16 %v1183
    %v1319 = vunpack.c.l.b16 %v1184
    %v1320 = vunpack.c.l.b16 %v1185
    %v1321 = vunpack.c.l.b16 %v1186
    %v1322 = vunpack.c.l.b16 %v1187
    %v1323 = vunpack.c.l.b16 %v1188
    %v1324 = vunpack.c.l.b16 %v1189
    %v1325 = vunpack.c.l.b16 %v1190
    %v1326 = vunpack.c.l.b16 %v1191
    %v1327 = vunpack.c.l.b16 %v1192
    %v1328 = vunpack.c.l.b16 %v1193
    %v1329 = vunpack.c.l.b16 %v1194
    %v1330 = vunpack.c.l.b16 %v1195
    %v1331 = vunpack.c.l.b16 %v1196
    %v1332 = vunpack.c.l.b16 %v1197
    %v1333 = vunpack.c.l.b16 %v1198
    %v1334 = vunpack.c.l.b16 %v1199
    %v1335 = vunpack.c.l.b16 %v1200
    %v1336 = vunpack.c.l.b16 %v1201
    %v1337 = vunpack.c.l.b16 %v1202
    %v1338 = vunpack.c.l.b16 %v1203
    %v1339 = vunpack.c.l.b16 %v1204
    %v1340 = vunpack.c.l.b16 %v1205
    %v1341 = vunpack.c.l.b16 %v1206
    %v1342 = vunpack.c.l.b16 %v1207
    %v1343 = vunpack.c.l.b16 %v1208
    %v1344 = vunpack.c.l.b16 %v1209
    %v1345 = vunpack.c.l.b16 %v1210
    %v1346 = vunpack.c.l.b16 %v1211
    %v1347 = vunpack.c.l.b16 %v1212
    %v1348 = vunpack.c.l.b16 %v1213
    %v1349 = vunpack.c.l.b16 %v1214
    %v1350 = vunpack.c.l.b16 %v1215
    %v1351 = vunpack.c.l.b16 %v1216
    %v1352 = vunpack.c.l.b16 %v1217
    %v1353 = vunpack.c.l.b16 %v1218
    %v1354 = vunpack.c.l.b16 %v1219
    %v1355 = vunpack.c.l.b16 %v1220
    %v1356 = vunpack.c.l.b16 %v1221
    %v1357 = vunpack.c.l.b16 %v1222
    %v1358 = vunpack.c.l.b16 %v1223
    %v1359 = vpack.c.b16 %v1296, %v1295
    %v1360 = vpack.c.b16 %v1298, %v1297
    %v1361 = vpack.c.b16 %v1300, %v1299
    %v1362 = vpack.c.b16 %v1302, %v1301
    %v1363 = vpack.c.b16 %v1304, %v1303
    %v1364 = vpack.c.b16 %v1306, %v1305
    %v1365 = vpack.c.b16 %v1308, %v1307
    %v1366 = vpack.c.b16 %v1310, %v1309
    %v1367 = vpack.c.b16 %v1312, %v1311
    %v1368 = vpack.c.b16 %v1314, %v1313
    %v1369 = vpack.c.b16 %v1316, %v1315
    %v1370 = vpack.c.b16 %v1318, %v1317
    %v1371 = vpack.c.b16 %v1320, %v1319
    %v1372 = vpack.c.b16 %v1322, %v1321
    %v1373 = vpack.c.b16 %v1324, %v1323
    %v1374 = vpack.c.b16 %v1326, %v1325
    %v1375 = vpack.c.b16 %v1328, %v1327
    %v1376 = vpack.c.b16 %v1330, %v1329
    %v1377 = vpack.c.b16 %v1332, %v1331
    %v1378 = vpack.c.b16 %v1334, %v1333
    %v1379 = vpack.c.b16 %v1336, %v1335
    %v1380 = vpack.c.b16 %v1338, %v1337
    %v1381 = vpack.c.b16 %v1340, %v1339
    %v1382 = vpack.c.b16 %v1342, %v1341
    %v1383 = vpack.c.b16 %v1344, %v1343
    %v1384 = vpack.c.b16 %v1346, %v1345
    %v1385 = vpack.c.b16 %v1348, %v1347
    %v1386 = vpack.c.b16 %v1350, %v1349
    %v1387 = vpack.c.b16 %v1352, %v1351
    %v1388 = vpack.c.b16 %v1354, %v1353
    %v1389 = vpack.c.b16 %v1356, %v1355
    %v1390 = vpack.c.b16 %v1358, %v1357
    %1423 = vmatprep.subr.bf16.mxu0 0
    %1424 = vmatpush1.bf16.msra.mxu0 %v1359
    %1425 = vmatprep.subr.bf16.mxu0 0
    %1426 = vmatpush1.bf16.msra.mxu0 %v1360
    %1427 = vmatprep.subr.bf16.mxu0 0
    %1428 = vmatpush1.bf16.msra.mxu0 %v1361
    %1429 = vmatprep.subr.bf16.mxu0 0
    %1430 = vmatpush1.bf16.msra.mxu0 %v1362
    %1431 = vmatprep.subr.bf16.mxu0 0
    %1432 = vmatpush1.bf16.msra.mxu0 %v1363
    %1433 = vmatprep.subr.bf16.mxu0 0
    %1434 = vmatpush1.bf16.msra.mxu0 %v1364
    %1435 = vmatprep.subr.bf16.mxu0 0
    %1436 = vmatpush1.bf16.msra.mxu0 %v1365
    %1437 = vmatprep.subr.bf16.mxu0 0
    %1438 = vmatpush1.bf16.msra.mxu0 %v1366
    %1439 = vmatprep.subr.bf16.mxu0 0
    %1440 = vmatpush1.bf16.msra.mxu0 %v1367
    %1441 = vmatprep.subr.bf16.mxu0 0
    %1442 = vmatpush1.bf16.msra.mxu0 %v1368
    %1443 = vmatprep.subr.bf16.mxu0 0
    %1444 = vmatpush1.bf16.msra.mxu0 %v1369
    %1445 = vmatprep.subr.bf16.mxu0 0
    %1446 = vmatpush1.bf16.msra.mxu0 %v1370
    %1447 = vmatprep.subr.bf16.mxu0 0
    %1448 = vmatpush1.bf16.msra.mxu0 %v1371
    %1449 = vmatprep.subr.bf16.mxu0 0
    %1450 = vmatpush1.bf16.msra.mxu0 %v1372
    %1451 = vmatprep.subr.bf16.mxu0 0
    %1452 = vmatpush1.bf16.msra.mxu0 %v1373
    %1453 = vmatprep.subr.bf16.mxu0 0
    %1454 = vmatpush1.bf16.msra.mxu0 %v1374
    %1455 = vmatprep.mubr.bf16.mxu0 %v1153
    %1456 = vmatmul.mubr.bf16.gmra.mrb[0].mxu0 %v1152
    %v1457 = vpop.f32.mrb[0].mxu0
    %v1458 = vadd.f32 %v1229, %v1457
    %v1459 = vpop.f32.mrb[0].mxu0
    %v1460 = vpop.f32.mrb[0].mxu0
    %v1461 = vadd.f32 %v1229, %v1460
    %v1462 = vpop.f32.mrb[0].mxu0
    %1463 = vmatprep.mubr.bf16.mxu0 %v1157
    %1464 = vmatmul.mubr.bf16.gmra.mrb[0].mxu0 %v1156
    %v1465 = vpop.f32.mrb[0].mxu0
    %v1466 = vadd.f32 %v1229, %v1465
    %v1467 = vpop.f32.mrb[0].mxu0
    %v1468 = vpop.f32.mrb[0].mxu0
    %v1469 = vpop.f32.mrb[0].mxu0
    %1470 = vdwg.mxu0
    %1471 = vmatprep.subr.bf16.mxu0 0
    %1472 = vmatpush1.bf16.msra.mxu0 %v1375
    %1473 = vmatprep.subr.bf16.mxu0 0
    %1474 = vmatpush1.bf16.msra.mxu0 %v1376
    %1475 = vmatprep.subr.bf16.mxu0 0
    %1476 = vmatpush1.bf16.msra.mxu0 %v1377
    %1477 = vmatprep.subr.bf16.mxu0 0
    %1478 = vmatpush1.bf16.msra.mxu0 %v1378
    %1479 = vmatprep.subr.bf16.mxu0 0
    %1480 = vmatpush1.bf16.msra.mxu0 %v1379
    %1481 = vmatprep.subr.bf16.mxu0 0
    %1482 = vmatpush1.bf16.msra.mxu0 %v1380
    %1483 = vmatprep.subr.bf16.mxu0 0
    %1484 = vmatpush1.bf16.msra.mxu0 %v1381
    %1485 = vmatprep.subr.bf16.mxu0 0
    %1486 = vmatpush1.bf16.msra.mxu0 %v1382
    %1487 = vmatprep.subr.bf16.mxu0 0
    %1488 = vmatpush1.bf16.msra.mxu0 %v1383
    %1489 = vmatprep.subr.bf16.mxu0 0
    %1490 = vmatpush1.bf16.msra.mxu0 %v1384
    %1491 = vmatprep.subr.bf16.mxu0 0
    %1492 = vmatpush1.bf16.msra.mxu0 %v1385
    %1493 = vmatprep.subr.bf16.mxu0 0
    %1494 = vmatpush1.bf16.msra.mxu0 %v1386
    %1495 = vmatprep.subr.bf16.mxu0 0
    %1496 = vmatpush1.bf16.msra.mxu0 %v1387
    %1497 = vmatprep.subr.bf16.mxu0 0
    %1498 = vmatpush1.bf16.msra.mxu0 %v1388
    %1499 = vmatprep.subr.bf16.mxu0 0
    %1500 = vmatpush1.bf16.msra.mxu0 %v1389
    %1501 = vmatprep.subr.bf16.mxu0 0
    %1502 = vmatpush1.bf16.msra.mxu0 %v1390
    %1503 = vmatprep.mubr.bf16.mxu0 %v1155
    %1504 = vmatmul.mubr.bf16.gmra.mrb[0].mxu0 %v1154
    %v1505 = vpop.f32.mrb[0].mxu0
    %v1506 = vadd.f32 %v1458, %v1505
    %v1507 = vpop.f32.mrb[0].mxu0
    %v1508 = vpop.f32.mrb[0].mxu0
    %v1509 = vadd.f32 %v1461, %v1508
    %v1510 = vpop.f32.mrb[0].mxu0
    %1511 = vmatprep.mubr.bf16.mxu0 %v1159
    %1512 = vmatmul.mubr.bf16.gmra.mrb[0].mxu0 %v1158
    %v1513 = vpop.f32.mrb[0].mxu0
    %v1514 = vadd.f32 %v1466, %v1513
    %v1515 = vpop.f32.mrb[0].mxu0
    %v1516 = vpop.f32.mrb[0].mxu0
    %v1517 = vpop.f32.mrb[0].mxu0
    %1518 = vdwg.mxu0
    %v1519 = vmax.f32 %v1506, 0.0
    %v1520 = vmax.f32 %v1509, 0.0
    %v1521 = vmax.f32 %v1514, 0.0
    %v1523 = vrot.slane %v1519, 2
    %1524 = vrot.lane.b32.xlu0 %v1523, 64
    %v1525 = vpop.permute.xlu0 %1524
    %v1527 = vrot.slane %v1519, 4
    %v1529 = vrot.slane %v1519, 6
    %1530 = vrot.lane.b32.xlu0 %v1529, 64
    %v1531 = vpop.permute.xlu0 %1530
    %v1534 = vrot.slane %v1520, 2
    %1535 = vrot.lane.b32.xlu0 %v1534, 64
    %v1536 = vpop.permute.xlu0 %1535
    %v1538 = vrot.slane %v1520, 4
    %v1540 = vrot.slane %v1520, 6
    %1541 = vrot.lane.b32.xlu0 %v1540, 64
    %v1542 = vpop.permute.xlu0 %1541
    %v1544 = vsel %vm1117, %v1519, %v1525
    %v1545 = vsel %vm1117, %v1527, %v1531
    %v1546 = vsel %vm1117, %v1520, %v1536
    %v1547 = vsel %vm1117, %v1538, %v1542
    %v1548 = vpack.c.bf16 %v1544, %v1544
    %v1549 = vpack.c.bf16 %v1545, %v1545
    %v1550 = vpack.c.bf16 %v1546, %v1546
    %v1551 = vpack.c.bf16 %v1547, %v1547
    %v1552 = vpack.c.bf16 %v1521, %v1521
    %v1553 = vld [vmem:[%s5] sm:$0xf]
    %v1554 = vld [vmem:[%s5 + $0x4] sm:$0xf]
    %v1555 = vld [vmem:[%s5 + $0x8] sm:$0xf]
    %v1556 = vld [vmem:[%s5 + $0xc] sm:$0xf]
    %v1557 = vld [vmem:[%s5 + $0x10] sm:$0xf]
    %v1558 = vld [vmem:[%s5 + $0x14] sm:$0xf]
    %v1559 = vld [vmem:[%s5 + $0x18] sm:$0xf]
    %v1560 = vld [vmem:[%s5 + $0x1c] sm:$0xf]
    %v1561 = vld [vmem:[%s5 + $0x20] sm:$0xf]
    %v1562 = vld [vmem:[%s5 + $0x24] sm:$0xf]
    %v1563 = vld [vmem:[%s5 + $0x28] sm:$0xf]
    %v1564 = vld [vmem:[%s5 + $0x2c] sm:$0xf]
    %v1565 = vld [vmem:[%s5 + $0x30] sm:$0xf]
    %v1566 = vld [vmem:[%s5 + $0x34] sm:$0xf]
    %v1567 = vld [vmem:[%s5 + $0x38] sm:$0xf]
    %v1568 = vld [vmem:[%s5 + $0x3c] sm:$0xf]
    %v1569 = vld [vmem:[%s5 + $0x40] sm:$0xf]
    %v1570 = vld [vmem:[%s5 + $0x44] sm:$0xf]
    %v1571 = vld [vmem:[%s5 + $0x48] sm:$0xf]
    %v1572 = vld [vmem:[%s5 + $0x4c] sm:$0xf]
    %v1573 = vld [vmem:[%s5 + $0x50] sm:$0xf]
    %v1574 = vld [vmem:[%s5 + $0x54] sm:$0xf]
    %v1575 = vld [vmem:[%s5 + $0x58] sm:$0xf]
    %v1576 = vld [vmem:[%s5 + $0x5c] sm:$0xf]
    %v1577 = vld [vmem:[%s5 + $0x60] sm:$0xf]
    %v1578 = vld [vmem:[%s5 + $0x64] sm:$0xf]
    %v1579 = vld [vmem:[%s5 + $0x68] sm:$0xf]
    %v1580 = vld [vmem:[%s5 + $0x6c] sm:$0xf]
    %v1581 = vld [vmem:[%s5 + $0x70] sm:$0xf]
    %v1582 = vld [vmem:[%s5 + $0x74] sm:$0xf]
    %v1583 = vld [vmem:[%s5 + $0x78] sm:$0xf]
    %v1584 = vld [vmem:[%s5 + $0x7c] sm:$0xf]
    %v1585 = vld [vmem:[%s5 + $0x80] sm:$0xf]
    %v1586 = vld [vmem:[%s5 + $0x84] sm:$0xf]
    %v1587 = vld [vmem:[%s5 + $0x88] sm:$0xf]
    %v1588 = vld [vmem:[%s5 + $0x8c] sm:$0xf]
    %v1589 = vld [vmem:[%s5 + $0x90] sm:$0xf]
    %v1590 = vld [vmem:[%s5 + $0x94] sm:$0xf]
    %v1591 = vld [vmem:[%s5 + $0x98] sm:$0xf]
    %v1592 = vld [vmem:[%s5 + $0x9c] sm:$0xf]
    %v1593 = vld [vmem:[%s5 + $0xa0] sm:$0xf]
    %v1594 = vld [vmem:[%s5 + $0xa4] sm:$0xf]
    %v1595 = vld [vmem:[%s5 + $0xa8] sm:$0xf]
    %v1596 = vld [vmem:[%s5 + $0xac] sm:$0xf]
    %v1597 = vld [vmem:[%s5 + $0xb0] sm:$0xf]
    %v1598 = vld [vmem:[%s5 + $0xb4] sm:$0xf]
    %v1599 = vld [vmem:[%s5 + $0xb8] sm:$0xf]
    %v1600 = vld [vmem:[%s5 + $0xbc] sm:$0xf]
    %v1601 = vld [vmem:[%s5 + $0xc0] sm:$0xf]
    %v1602 = vld [vmem:[%s5 + $0xc4] sm:$0xf]
    %v1603 = vld [vmem:[%s5 + $0xc8] sm:$0xf]
    %v1604 = vld [vmem:[%s5 + $0xcc] sm:$0xf]
    %v1605 = vld [vmem:[%s5 + $0xd0] sm:$0xf]
    %v1606 = vld [vmem:[%s5 + $0xd4] sm:$0xf]
    %v1607 = vld [vmem:[%s5 + $0xd8] sm:$0xf]
    %v1608 = vld [vmem:[%s5 + $0xdc] sm:$0xf]
    %v1609 = vld [vmem:[%s5 + $0xe0] sm:$0xf]
    %v1610 = vld [vmem:[%s5 + $0xe4] sm:$0xf]
    %v1611 = vld [vmem:[%s5 + $0xe8] sm:$0xf]
    %v1612 = vld [vmem:[%s5 + $0xec] sm:$0xf]
    %v1613 = vld [vmem:[%s5 + $0xf0] sm:$0xf]
    %v1614 = vld [vmem:[%s5 + $0xf4] sm:$0xf]
    %v1615 = vld [vmem:[%s5 + $0xf8] sm:$0xf]
    %v1616 = vld [vmem:[%s5 + $0xfc] sm:$0xf]
    %v1617 = vld [vmem:[%s5 + $0x100] sm:$0xf]
    %v1618 = vld [vmem:[%s5 + $0x104] sm:$0xf]
    %v1619 = vld [vmem:[%s5 + $0x108] sm:$0xf]
    %v1620 = vld [vmem:[%s5 + $0x10c] sm:$0xf]
    %v1621 = vld [vmem:[%s5 + $0x110] sm:$0xf]
    %v1622 = vld [vmem:[%s5 + $0x114] sm:$0xf]
    %v1623 = vld [vmem:[%s5 + $0x118] sm:$0xf]
    %v1624 = vld [vmem:[%s5 + $0x11c] sm:$0xf]
    %v1625 = vld [vmem:[%s6] sm:$0x1]
    %v1627 = vlaneseq
    %v1628 = vshrl.u32 %v1627, 7
    %v1629 = vsub.s32 0, %v1628
    %v1630 = vrot.slane %v1625, %v1629
    %v1704 = vunpack.c.l.b16 %v1553
    %v1705 = vunpack.c.l.b16 %v1554
    %v1706 = vunpack.c.l.b16 %v1555
    %v1707 = vunpack.c.l.b16 %v1556
    %v1708 = vunpack.c.l.b16 %v1557
    %v1709 = vunpack.c.l.b16 %v1558
    %v1710 = vunpack.c.l.b16 %v1559
    %v1711 = vunpack.c.l.b16 %v1560
    %v1712 = vunpack.c.l.b16 %v1561
    %v1713 = vunpack.c.l.b16 %v1562
    %v1714 = vunpack.c.l.b16 %v1563
    %v1715 = vunpack.c.l.b16 %v1564
    %v1716 = vunpack.c.l.b16 %v1565
    %v1717 = vunpack.c.l.b16 %v1566
    %v1718 = vunpack.c.l.b16 %v1567
    %v1719 = vunpack.c.l.b16 %v1568
    %v1720 = vunpack.c.l.b16 %v1569
    %v1721 = vunpack.c.l.b16 %v1570
    %v1722 = vunpack.c.l.b16 %v1571
    %v1723 = vunpack.c.l.b16 %v1572
    %v1724 = vunpack.c.l.b16 %v1573
    %v1725 = vunpack.c.l.b16 %v1574
    %v1726 = vunpack.c.l.b16 %v1575
    %v1727 = vunpack.c.l.b16 %v1576
    %v1728 = vunpack.c.l.b16 %v1577
    %v1729 = vunpack.c.l.b16 %v1578
    %v1730 = vunpack.c.l.b16 %v1579
    %v1731 = vunpack.c.l.b16 %v1580
    %v1732 = vunpack.c.l.b16 %v1581
    %v1733 = vunpack.c.l.b16 %v1582
    %v1734 = vunpack.c.l.b16 %v1583
    %v1735 = vunpack.c.l.b16 %v1584
    %v1736 = vunpack.c.l.b16 %v1585
    %v1737 = vunpack.c.l.b16 %v1586
    %v1738 = vunpack.c.l.b16 %v1587
    %v1739 = vunpack.c.l.b16 %v1588
    %v1740 = vunpack.c.l.b16 %v1589
    %v1741 = vunpack.c.l.b16 %v1590
    %v1742 = vunpack.c.l.b16 %v1591
    %v1743 = vunpack.c.l.b16 %v1592
    %v1744 = vunpack.c.l.b16 %v1593
    %v1745 = vunpack.c.l.b16 %v1594
    %v1746 = vunpack.c.l.b16 %v1595
    %v1747 = vunpack.c.l.b16 %v1596
    %v1748 = vunpack.c.l.b16 %v1597
    %v1749 = vunpack.c.l.b16 %v1598
    %v1750 = vunpack.c.l.b16 %v1599
    %v1751 = vunpack.c.l.b16 %v1600
    %v1752 = vunpack.c.l.b16 %v1601
    %v1753 = vunpack.c.l.b16 %v1602
    %v1754 = vunpack.c.l.b16 %v1603
    %v1755 = vunpack.c.l.b16 %v1604
    %v1756 = vunpack.c.l.b16 %v1605
    %v1757 = vunpack.c.l.b16 %v1606
    %v1758 = vunpack.c.l.b16 %v1607
    %v1759 = vunpack.c.l.b16 %v1608
    %v1760 = vunpack.c.l.b16 %v1609
    %v1761 = vunpack.c.l.b16 %v1610
    %v1762 = vunpack.c.l.b16 %v1611
    %v1763 = vunpack.c.l.b16 %v1612
    %v1764 = vunpack.c.l.b16 %v1613
    %v1765 = vunpack.c.l.b16 %v1614
    %v1766 = vunpack.c.l.b16 %v1615
    %v1767 = vunpack.c.l.b16 %v1616
    %v1768 = vunpack.c.l.b16 %v1617
    %v1769 = vunpack.c.l.b16 %v1618
    %v1770 = vunpack.c.l.b16 %v1619
    %v1771 = vunpack.c.l.b16 %v1620
    %v1772 = vunpack.c.l.b16 %v1621
    %v1773 = vunpack.c.l.b16 %v1622
    %v1774 = vunpack.c.l.b16 %v1623
    %v1775 = vunpack.c.l.b16 %v1624
    %v1776 = vpack.c.b16 %v1705, %v1704
    %v1777 = vpack.c.b16 %v1707, %v1706
    %v1778 = vpack.c.b16 %v1709, %v1708
    %v1779 = vpack.c.b16 %v1711, %v1710
    %v1780 = vpack.c.b16 %v1713, %v1712
    %v1781 = vpack.c.b16 %v1715, %v1714
    %v1782 = vpack.c.b16 %v1717, %v1716
    %v1783 = vpack.c.b16 %v1719, %v1718
    %v1784 = vpack.c.b16 %v1721, %v1720
    %v1785 = vpack.c.b16 %v1723, %v1722
    %v1786 = vpack.c.b16 %v1725, %v1724
    %v1787 = vpack.c.b16 %v1727, %v1726
    %v1788 = vpack.c.b16 %v1729, %v1728
    %v1789 = vpack.c.b16 %v1731, %v1730
    %v1790 = vpack.c.b16 %v1733, %v1732
    %v1791 = vpack.c.b16 %v1735, %v1734
    %v1792 = vpack.c.b16 %v1737, %v1736
    %v1793 = vpack.c.b16 %v1739, %v1738
    %v1794 = vpack.c.b16 %v1741, %v1740
    %v1795 = vpack.c.b16 %v1743, %v1742
    %v1796 = vpack.c.b16 %v1745, %v1744
    %v1797 = vpack.c.b16 %v1747, %v1746
    %v1798 = vpack.c.b16 %v1749, %v1748
    %v1799 = vpack.c.b16 %v1751, %v1750
    %v1800 = vpack.c.b16 %v1753, %v1752
    %v1801 = vpack.c.b16 %v1755, %v1754
    %v1802 = vpack.c.b16 %v1757, %v1756
    %v1803 = vpack.c.b16 %v1759, %v1758
    %v1804 = vpack.c.b16 %v1761, %v1760
    %v1805 = vpack.c.b16 %v1763, %v1762
    %v1806 = vpack.c.b16 %v1765, %v1764
    %v1807 = vpack.c.b16 %v1767, %v1766
    %v1808 = vpack.c.b16 %v1769, %v1768
    %v1809 = vpack.c.b16 %v1771, %v1770
    %v1810 = vpack.c.b16 %v1773, %v1772
    %v1811 = vpack.c.b16 %v1775, %v1774
    %v1849 = vsel %vm1117, %v1552, 0
    %1851 = vmatprep.subr.bf16.mxu0 0
    %1852 = vmatpush1.bf16.msra.mxu0 %v1776
    %1853 = vmatprep.subr.bf16.mxu0 0
    %1854 = vmatpush1.bf16.msra.mxu0 %v1777
    %1855 = vmatprep.subr.bf16.mxu0 0
    %1856 = vmatpush1.bf16.msra.mxu0 %v1778
    %1857 = vmatprep.subr.bf16.mxu0 0
    %1858 = vmatpush1.bf16.msra.mxu0 %v1779
    %1859 = vmatprep.subr.bf16.mxu0 0
    %1860 = vmatpush1.bf16.msra.mxu0 %v1780
    %1861 = vmatprep.subr.bf16.mxu0 0
    %1862 = vmatpush1.bf16.msra.mxu0 %v1781
    %1863 = vmatprep.subr.bf16.mxu0 0
    %1864 = vmatpush1.bf16.msra.mxu0 %v1782
    %1865 = vmatprep.subr.bf16.mxu0 0
    %1866 = vmatpush1.bf16.msra.mxu0 %v1783
    %1867 = vmatprep.subr.bf16.mxu0 0
    %1868 = vmatpush1.bf16.msra.mxu0 %v1784
    %1869 = vmatprep.subr.bf16.mxu0 0
    %1870 = vmatpush1.bf16.msra.mxu0 %v1785
    %1871 = vmatprep.subr.bf16.mxu0 0
    %1872 = vmatpush1.bf16.msra.mxu0 %v1786
    %1873 = vmatprep.subr.bf16.mxu0 0
    %1874 = vmatpush1.bf16.msra.mxu0 %v1787
    %1875 = vmatprep.subr.bf16.mxu0 0
    %1876 = vmatpush1.bf16.msra.mxu0 %v1788
    %1877 = vmatprep.subr.bf16.mxu0 0
    %1878 = vmatpush1.bf16.msra.mxu0 %v1789
    %1879 = vmatprep.subr.bf16.mxu0 0
    %1880 = vmatpush1.bf16.msra.mxu0 %v1790
    %1881 = vmatprep.subr.bf16.mxu0 0
    %1882 = vmatpush1.bf16.msra.mxu0 %v1791
    %1883 = vmatprep.mubr.bf16.mxu0 %v1549
    %1884 = vmatmul.mubr.bf16.gmra.mrb[0].mxu0 %v1548
    %v1885 = vpop.f32.mrb[0].mxu0
    %v1886 = vadd.f32 %v1630, %v1885
    %v1887 = vpop.f32.mrb[0].mxu0
    %v1888 = vpop.f32.mrb[0].mxu0
    %v1889 = vpop.f32.mrb[0].mxu0
    %1890 = vdwg.mxu0
    %1891 = vmatprep.subr.bf16.mxu0 0
    %1892 = vmatpush1.bf16.msra.mxu0 %v1792
    %1893 = vmatprep.subr.bf16.mxu0 0
    %1894 = vmatpush1.bf16.msra.mxu0 %v1793
    %1895 = vmatprep.subr.bf16.mxu0 0
    %1896 = vmatpush1.bf16.msra.mxu0 %v1794
    %1897 = vmatprep.subr.bf16.mxu0 0
    %1898 = vmatpush1.bf16.msra.mxu0 %v1795
    %1899 = vmatprep.subr.bf16.mxu0 0
    %1900 = vmatpush1.bf16.msra.mxu0 %v1796
    %1901 = vmatprep.subr.bf16.mxu0 0
    %1902 = vmatpush1.bf16.msra.mxu0 %v1797
    %1903 = vmatprep.subr.bf16.mxu0 0
    %1904 = vmatpush1.bf16.msra.mxu0 %v1798
    %1905 = vmatprep.subr.bf16.mxu0 0
    %1906 = vmatpush1.bf16.msra.mxu0 %v1799
    %1907 = vmatprep.subr.bf16.mxu0 0
    %1908 = vmatpush1.bf16.msra.mxu0 %v1800
    %1909 = vmatprep.subr.bf16.mxu0 0
    %1910 = vmatpush1.bf16.msra.mxu0 %v1801
    %1911 = vmatprep.subr.bf16.mxu0 0
    %1912 = vmatpush1.bf16.msra.mxu0 %v1802
    %1913 = vmatprep.subr.bf16.mxu0 0
    %1914 = vmatpush1.bf16.msra.mxu0 %v1803
    %1915 = vmatprep.subr.bf16.mxu0 0
    %1916 = vmatpush1.bf16.msra.mxu0 %v1804
    %1917 = vmatprep.subr.bf16.mxu0 0
    %1918 = vmatpush1.bf16.msra.mxu0 %v1805
    %1919 = vmatprep.subr.bf16.mxu0 0
    %1920 = vmatpush1.bf16.msra.mxu0 %v1806
    %1921 = vmatprep.subr.bf16.mxu0 0
    %1922 = vmatpush1.bf16.msra.mxu0 %v1807
    %1923 = vmatprep.mubr.bf16.mxu0 %v1551
    %1924 = vmatmul.mubr.bf16.gmra.mrb[0].mxu0 %v1550
    %v1925 = vpop.f32.mrb[0].mxu0
    %v1926 = vadd.f32 %v1886, %v1925
    %v1927 = vpop.f32.mrb[0].mxu0
    %v1928 = vpop.f32.mrb[0].mxu0
    %v1929 = vpop.f32.mrb[0].mxu0
    %1930 = vdwg.mxu0
    %1931 = vmatprep.subr.bf16.mxu0 0
    %1932 = vmatpush1.bf16.msra.mxu0 %v1808
    %1933 = vmatprep.subr.bf16.mxu0 0
    %1934 = vmatpush1.bf16.msra.mxu0 %v1809
    %1935 = vmatprep.subr.bf16.mxu0 0
    %1936 = vmatpush1.bf16.msra.mxu0 %v1810
    %1937 = vmatprep.subr.bf16.mxu0 0
    %1938 = vmatpush1.bf16.msra.mxu0 %v1811
    %1939 = vmatprep.subr.bf16.mxu0 0
    %1940 = vmatpush1.bf16.msra.mxu0 0
    %1941 = vmatprep.subr.bf16.mxu0 0
    %1942 = vmatpush1.bf16.msra.mxu0 0
    %1943 = vmatprep.subr.bf16.mxu0 0
    %1944 = vmatpush1.bf16.msra.mxu0 0
    %1945 = vmatprep.subr.bf16.mxu0 0
    %1946 = vmatpush1.bf16.msra.mxu0 0
    %1947 = vmatprep.subr.bf16.mxu0 0
    %1948 = vmatpush1.bf16.msra.mxu0 0
    %1949 = vmatprep.subr.bf16.mxu0 0
    %1950 = vmatpush1.bf16.msra.mxu0 0
    %1951 = vmatprep.subr.bf16.mxu0 0
    %1952 = vmatpush1.bf16.msra.mxu0 0
    %1953 = vmatprep.subr.bf16.mxu0 0
    %1954 = vmatpush1.bf16.msra.mxu0 0
    %1955 = vmatprep.subr.bf16.mxu0 0
    %1956 = vmatpush1.bf16.msra.mxu0 0
    %1957 = vmatprep.subr.bf16.mxu0 0
    %1958 = vmatpush1.bf16.msra.mxu0 0
    %1959 = vmatprep.subr.bf16.mxu0 0
    %1960 = vmatpush1.bf16.msra.mxu0 0
    %1961 = vmatprep.subr.bf16.mxu0 0
    %1962 = vmatpush1.bf16.msra.mxu0 0
    %1963 = vmatprep.mubr.bf16.mxu0 0
    %1964 = vmatmul.mubr.bf16.gmra.mrb[0].mxu0 %v1849
    %v1965 = vpop.f32.mrb[0].mxu0
    %v1966 = vadd.f32 %v1926, %v1965
    %v1967 = vpop.f32.mrb[0].mxu0
    %v1968 = vpop.f32.mrb[0].mxu0
    %v1969 = vpop.f32.mrb[0].mxu0
    %1970 = vdwg.mxu0
    %v1971 = vmax.f32 %v1966, 0.0
    %s1972 = smul.u32 4, 8
    %s1973 = smul.u32 %s1972, 8
    %s1974 = sshll.u32 %s1973, 4
    %1975 = dma.done [#allocation3], %s1974
    %v1976 = vpack.c.bf16 %v1971, %v1971
    %v1977 = vld [vmem:[#allocation2] sm:$0xff]
    %v1978 = vld [vmem:[#allocation2 + $0x8] sm:$0xff]
    %v1979 = vld [vmem:[#allocation2 + $0x10] sm:$0xff]
    %v1980 = vld [vmem:[#allocation2 + $0x18] sm:$0xff]
    %v1981 = vld [vmem:[#allocation2 + $0x20] sm:$0xff]
    %v1982 = vld [vmem:[#allocation2 + $0x28] sm:$0xff]
    %v1983 = vld [vmem:[#allocation2 + $0x30] sm:$0xff]
    %v1984 = vld [vmem:[#allocation2 + $0x38] sm:$0xff]
    %v1985 = vld [vmem:[#allocation2 + $0x40] sm:$0xff]
    %v1986 = vld [vmem:[#allocation2 + $0x48] sm:$0xff]
    %v1987 = vld [vmem:[#allocation2 + $0x50] sm:$0xff]
    %v1988 = vld [vmem:[#allocation2 + $0x58] sm:$0xff]
    %v1989 = vld [vmem:[#allocation2 + $0x60] sm:$0xff]
    %v1990 = vld [vmem:[#allocation2 + $0x68] sm:$0xff]
    %v1991 = vld [vmem:[#allocation2 + $0x70] sm:$0xff]
    %v1992 = vld [vmem:[#allocation2 + $0x78] sm:$0xff]
    %v1993 = vld [vmem:[#allocation2 + $0x80] sm:$0xff]
    %v1994 = vld [vmem:[#allocation2 + $0x88] sm:$0xff]
    %v1995 = vld [vmem:[#allocation2 + $0x90] sm:$0xff]
    %v1996 = vld [vmem:[#allocation2 + $0x98] sm:$0xff]
    %v1997 = vld [vmem:[#allocation2 + $0xa0] sm:$0xff]
    %v1998 = vld [vmem:[#allocation2 + $0xa8] sm:$0xff]
    %v1999 = vld [vmem:[#allocation2 + $0xb0] sm:$0xff]
    %v2000 = vld [vmem:[#allocation2 + $0xb8] sm:$0xff]
    %v2001 = vld [vmem:[#allocation2 + $0xc0] sm:$0xff]
    %v2002 = vld [vmem:[#allocation2 + $0xc8] sm:$0xff]
    %v2003 = vld [vmem:[#allocation2 + $0xd0] sm:$0xff]
    %v2004 = vld [vmem:[#allocation2 + $0xd8] sm:$0xff]
    %v2005 = vld [vmem:[#allocation2 + $0xe0] sm:$0xff]
    %v2006 = vld [vmem:[#allocation2 + $0xe8] sm:$0xff]
    %v2007 = vld [vmem:[#allocation2 + $0xf0] sm:$0xff]
    %v2008 = vld [vmem:[#allocation2 + $0xf8] sm:$0xff]
    %v2009 = vld [vmem:[%s7] sm:$0xff]
    %v2011 = vlaneseq
    %v2012 = vshrl.u32 %v2011, 7
    %v2013 = vsub.s32 0, %v2012
    %v2014 = vrot.slane %v2009, %v2013
    %v2015 = vlaneseq
    %v2016 = vshrl.u32 %v2015, 7
    %v2017 = vsub.s32 1, %v2016
    %v2018 = vrot.slane %v2009, %v2017
    %v2019 = vlaneseq
    %v2020 = vshrl.u32 %v2019, 7
    %v2021 = vsub.s32 2, %v2020
    %v2022 = vrot.slane %v2009, %v2021
    %v2023 = vlaneseq
    %v2024 = vshrl.u32 %v2023, 7
    %v2025 = vsub.s32 3, %v2024
    %v2026 = vrot.slane %v2009, %v2025
    %v2027 = vlaneseq
    %v2028 = vshrl.u32 %v2027, 7
    %v2029 = vsub.s32 4, %v2028
    %v2030 = vrot.slane %v2009, %v2029
    %v2031 = vlaneseq
    %v2032 = vshrl.u32 %v2031, 7
    %v2033 = vsub.s32 5, %v2032
    %v2034 = vrot.slane %v2009, %v2033
    %v2035 = vlaneseq
    %v2036 = vshrl.u32 %v2035, 7
    %v2037 = vsub.s32 6, %v2036
    %v2038 = vrot.slane %v2009, %v2037
    %v2039 = vlaneseq
    %v2040 = vshrl.u32 %v2039, 7
    %v2041 = vsub.s32 7, %v2040
    %v2042 = vrot.slane %v2009, %v2041
    %v2052 = vsel %vm1117, %v1976, 0
    %2054 = vmatprep.subr.bf16.mxu0 %v1978
    %2055 = vmatpush1.bf16.msra.mxu0 %v1977
    %2056 = vmatprep.subr.bf16.mxu0 %v1986
    %2057 = vmatpush1.bf16.msra.mxu0 %v1985
    %2058 = vmatprep.subr.bf16.mxu0 %v1994
    %2059 = vmatpush1.bf16.msra.mxu0 %v1993
    %2060 = vmatprep.subr.bf16.mxu0 %v2002
    %2061 = vmatpush1.bf16.msra.mxu0 %v2001
    %2062 = vmatprep.subr.bf16.mxu0 0
    %2063 = vmatpush1.bf16.msra.mxu0 0
    %2064 = vmatprep.subr.bf16.mxu0 0
    %2065 = vmatpush1.bf16.msra.mxu0 0
    %2066 = vmatprep.subr.bf16.mxu0 0
    %2067 = vmatpush1.bf16.msra.mxu0 0
    %2068 = vmatprep.subr.bf16.mxu0 0
    %2069 = vmatpush1.bf16.msra.mxu0 0
    %2070 = vmatprep.subr.bf16.mxu0 0
    %2071 = vmatpush1.bf16.msra.mxu0 0
    %2072 = vmatprep.subr.bf16.mxu0 0
    %2073 = vmatpush1.bf16.msra.mxu0 0
    %2074 = vmatprep.subr.bf16.mxu0 0
    %2075 = vmatpush1.bf16.msra.mxu0 0
    %2076 = vmatprep.subr.bf16.mxu0 0
    %2077 = vmatpush1.bf16.msra.mxu0 0
    %2078 = vmatprep.subr.bf16.mxu0 0
    %2079 = vmatpush1.bf16.msra.mxu0 0
    %2080 = vmatprep.subr.bf16.mxu0 0
    %2081 = vmatpush1.bf16.msra.mxu0 0
    %2082 = vmatprep.subr.bf16.mxu0 0
    %2083 = vmatpush1.bf16.msra.mxu0 0
    %2084 = vmatprep.subr.bf16.mxu0 0
    %2085 = vmatpush1.bf16.msra.mxu0 0
    %2086 = vmatprep.mubr.bf16.mxu0 0
    %2087 = vmatmul.mubr.bf16.gmra.mrb[0].mxu0 %v2052
    %v2088 = vpop.f32.mrb[0].mxu0
    %v2089 = vadd.f32 %v2014, %v2088
    %v2090 = vpop.f32.mrb[0].mxu0
    %v2091 = vadd.f32 %v2018, %v2090
    %v2092 = vpop.f32.mrb[0].mxu0
    %v2093 = vpop.f32.mrb[0].mxu0
    %2094 = vdwg.mxu0
    %2095 = vmatprep.subr.bf16.mxu0 %v1980
    %2096 = vmatpush1.bf16.msra.mxu0 %v1979
    %2097 = vmatprep.subr.bf16.mxu0 %v1988
    %2098 = vmatpush1.bf16.msra.mxu0 %v1987
    %2099 = vmatprep.subr.bf16.mxu0 %v1996
    %2100 = vmatpush1.bf16.msra.mxu0 %v1995
    %2101 = vmatprep.subr.bf16.mxu0 %v2004
    %2102 = vmatpush1.bf16.msra.mxu0 %v2003
    %2103 = vmatprep.subr.bf16.mxu0 0
    %2104 = vmatpush1.bf16.msra.mxu0 0
    %2105 = vmatprep.subr.bf16.mxu0 0
    %2106 = vmatpush1.bf16.msra.mxu0 0
    %2107 = vmatprep.subr.bf16.mxu0 0
    %2108 = vmatpush1.bf16.msra.mxu0 0
    %2109 = vmatprep.subr.bf16.mxu0 0
    %2110 = vmatpush1.bf16.msra.mxu0 0
    %2111 = vmatprep.subr.bf16.mxu0 0
    %2112 = vmatpush1.bf16.msra.mxu0 0
    %2113 = vmatprep.subr.bf16.mxu0 0
    %2114 = vmatpush1.bf16.msra.mxu0 0
    %2115 = vmatprep.subr.bf16.mxu0 0
    %2116 = vmatpush1.bf16.msra.mxu0 0
    %2117 = vmatprep.subr.bf16.mxu0 0
    %2118 = vmatpush1.bf16.msra.mxu0 0
    %2119 = vmatprep.subr.bf16.mxu0 0
    %2120 = vmatpush1.bf16.msra.mxu0 0
    %2121 = vmatprep.subr.bf16.mxu0 0
    %2122 = vmatpush1.bf16.msra.mxu0 0
    %2123 = vmatprep.subr.bf16.mxu0 0
    %2124 = vmatpush1.bf16.msra.mxu0 0
    %2125 = vmatprep.subr.bf16.mxu0 0
    %2126 = vmatpush1.bf16.msra.mxu0 0
    %2127 = vmatprep.mubr.bf16.mxu0 0
    %2128 = vmatmul.mubr.bf16.gmra.mrb[0].mxu0 %v2052
    %v2129 = vpop.f32.mrb[0].mxu0
    %v2130 = vadd.f32 %v2022, %v2129
    %v2131 = vpop.f32.mrb[0].mxu0
    %v2132 = vadd.f32 %v2026, %v2131
    %v2133 = vpop.f32.mrb[0].mxu0
    %v2134 = vpop.f32.mrb[0].mxu0
    %2135 = vdwg.mxu0
    %2136 = vmatprep.subr.bf16.mxu0 %v1982
    %2137 = vmatpush1.bf16.msra.mxu0 %v1981
    %2138 = vmatprep.subr.bf16.mxu0 %v1990
    %2139 = vmatpush1.bf16.msra.mxu0 %v1989
    %2140 = vmatprep.subr.bf16.mxu0 %v1998
    %2141 = vmatpush1.bf16.msra.mxu0 %v1997
    %2142 = vmatprep.subr.bf16.mxu0 %v2006
    %2143 = vmatpush1.bf16.msra.mxu0 %v2005
    %2144 = vmatprep.subr.bf16.mxu0 0
    %2145 = vmatpush1.bf16.msra.mxu0 0
    %2146 = vmatprep.subr.bf16.mxu0 0
    %2147 = vmatpush1.bf16.msra.mxu0 0
    %2148 = vmatprep.subr.bf16.mxu0 0
    %2149 = vmatpush1.bf16.msra.mxu0 0
    %2150 = vmatprep.subr.bf16.mxu0 0
    %2151 = vmatpush1.bf16.msra.mxu0 0
    %2152 = vmatprep.subr.bf16.mxu0 0
    %2153 = vmatpush1.bf16.msra.mxu0 0
    %2154 = vmatprep.subr.bf16.mxu0 0
    %2155 = vmatpush1.bf16.msra.mxu0 0
    %2156 = vmatprep.subr.bf16.mxu0 0
    %2157 = vmatpush1.bf16.msra.mxu0 0
    %2158 = vmatprep.subr.bf16.mxu0 0
    %2159 = vmatpush1.bf16.msra.mxu0 0
    %2160 = vmatprep.subr.bf16.mxu0 0
    %2161 = vmatpush1.bf16.msra.mxu0 0
    %2162 = vmatprep.subr.bf16.mxu0 0
    %2163 = vmatpush1.bf16.msra.mxu0 0
    %2164 = vmatprep.subr.bf16.mxu0 0
    %2165 = vmatpush1.bf16.msra.mxu0 0
    %2166 = vmatprep.subr.bf16.mxu0 0
    %2167 = vmatpush1.bf16.msra.mxu0 0
    %2168 = vmatprep.mubr.bf16.mxu0 0
    %2169 = vmatmul.mubr.bf16.gmra.mrb[0].mxu0 %v2052
    %v2170 = vpop.f32.mrb[0].mxu0
    %v2171 = vadd.f32 %v2030, %v2170
    %v2172 = vpop.f32.mrb[0].mxu0
    %v2173 = vadd.f32 %v2034, %v2172
    %v2174 = vpop.f32.mrb[0].mxu0
    %v2175 = vpop.f32.mrb[0].mxu0
    %2176 = vdwg.mxu0
    %2177 = vmatprep.subr.bf16.mxu0 %v1984
    %2178 = vmatpush1.bf16.msra.mxu0 %v1983
    %2179 = vmatprep.subr.bf16.mxu0 %v1992
    %2180 = vmatpush1.bf16.msra.mxu0 %v1991
    %2181 = vmatprep.subr.bf16.mxu0 %v2000
    %2182 = vmatpush1.bf16.msra.mxu0 %v1999
    %2183 = vmatprep.subr.bf16.mxu0 %v2008
    %2184 = vmatpush1.bf16.msra.mxu0 %v2007
    %2185 = vmatprep.subr.bf16.mxu0 0
    %2186 = vmatpush1.bf16.msra.mxu0 0
    %2187 = vmatprep.subr.bf16.mxu0 0
    %2188 = vmatpush1.bf16.msra.mxu0 0
    %2189 = vmatprep.subr.bf16.mxu0 0
    %2190 = vmatpush1.bf16.msra.mxu0 0
    %2191 = vmatprep.subr.bf16.mxu0 0
    %2192 = vmatpush1.bf16.msra.mxu0 0
    %2193 = vmatprep.subr.bf16.mxu0 0
    %2194 = vmatpush1.bf16.msra.mxu0 0
    %2195 = vmatprep.subr.bf16.mxu0 0
    %2196 = vmatpush1.bf16.msra.mxu0 0
    %2197 = vmatprep.subr.bf16.mxu0 0
    %2198 = vmatpush1.bf16.msra.mxu0 0
    %2199 = vmatprep.subr.bf16.mxu0 0
    %2200 = vmatpush1.bf16.msra.mxu0 0
    %2201 = vmatprep.subr.bf16.mxu0 0
    %2202 = vmatpush1.bf16.msra.mxu0 0
    %2203 = vmatprep.subr.bf16.mxu0 0
    %2204 = vmatpush1.bf16.msra.mxu0 0
    %2205 = vmatprep.subr.bf16.mxu0 0
    %2206 = vmatpush1.bf16.msra.mxu0 0
    %2207 = vmatprep.subr.bf16.mxu0 0
    %2208 = vmatpush1.bf16.msra.mxu0 0
    %2209 = vmatprep.mubr.bf16.mxu0 0
    %2210 = vmatmul.mubr.bf16.gmra.mrb[0].mxu0 %v2052
    %v2211 = vpop.f32.mrb[0].mxu0
    %v2212 = vadd.f32 %v2038, %v2211
    %v2213 = vpop.f32.mrb[0].mxu0
    %v2214 = vadd.f32 %v2042, %v2213
    %v2215 = vpop.f32.mrb[0].mxu0
    %v2216 = vpop.f32.mrb[0].mxu0
    %2217 = vdwg.mxu0
    %v2218 = vmax.f32 %v2089, 0.0
    %v2219 = vmax.f32 %v2091, 0.0
    %v2220 = vmax.f32 %v2130, 0.0
    %v2221 = vmax.f32 %v2132, 0.0
    %v2222 = vmax.f32 %v2171, 0.0
    %v2223 = vmax.f32 %v2173, 0.0
    %v2224 = vmax.f32 %v2212, 0.0
    %v2225 = vmax.f32 %v2214, 0.0
    %v2226 = vpack.c.bf16 %v2218, %v2218
    %v2227 = vpack.c.bf16 %v2219, %v2219
    %v2228 = vpack.c.bf16 %v2220, %v2220
    %v2229 = vpack.c.bf16 %v2221, %v2221
    %v2230 = vld [vmem:[%s8] sm:$0xf]
    %v2231 = vld [vmem:[%s8 + $0x4] sm:$0xf]
    %v2232 = vld [vmem:[%s8 + $0x8] sm:$0xf]
    %v2233 = vld [vmem:[%s8 + $0xc] sm:$0xf]
    %v2234 = vld [vmem:[%s8 + $0x10] sm:$0xf]
    %v2235 = vld [vmem:[%s8 + $0x14] sm:$0xf]
    %v2236 = vld [vmem:[%s8 + $0x18] sm:$0xf]
    %v2237 = vld [vmem:[%s8 + $0x1c] sm:$0xf]
    %v2238 = vld [vmem:[%s8 + $0x20] sm:$0xf]
    %v2239 = vld [vmem:[%s8 + $0x24] sm:$0xf]
    %v2240 = vld [vmem:[%s8 + $0x28] sm:$0xf]
    %v2241 = vld [vmem:[%s8 + $0x2c] sm:$0xf]
    %v2242 = vld [vmem:[%s8 + $0x30] sm:$0xf]
    %v2243 = vld [vmem:[%s8 + $0x34] sm:$0xf]
    %v2244 = vld [vmem:[%s8 + $0x38] sm:$0xf]
    %v2245 = vld [vmem:[%s8 + $0x3c] sm:$0xf]
    %v2246 = vld [vmem:[%s8 + $0x40] sm:$0xf]
    %v2247 = vld [vmem:[%s8 + $0x44] sm:$0xf]
    %v2248 = vld [vmem:[%s8 + $0x48] sm:$0xf]
    %v2249 = vld [vmem:[%s8 + $0x4c] sm:$0xf]
    %v2250 = vld [vmem:[%s8 + $0x50] sm:$0xf]
    %v2251 = vld [vmem:[%s8 + $0x54] sm:$0xf]
    %v2252 = vld [vmem:[%s8 + $0x58] sm:$0xf]
    %v2253 = vld [vmem:[%s8 + $0x5c] sm:$0xf]
    %v2254 = vld [vmem:[%s8 + $0x60] sm:$0xf]
    %v2255 = vld [vmem:[%s8 + $0x64] sm:$0xf]
    %v2256 = vld [vmem:[%s8 + $0x68] sm:$0xf]
    %v2257 = vld [vmem:[%s8 + $0x6c] sm:$0xf]
    %v2258 = vld [vmem:[%s8 + $0x70] sm:$0xf]
    %v2259 = vld [vmem:[%s8 + $0x74] sm:$0xf]
    %v2260 = vld [vmem:[%s8 + $0x78] sm:$0xf]
    %v2261 = vld [vmem:[%s8 + $0x7c] sm:$0xf]
    %v2262 = vld [vmem:[%s8 + $0x80] sm:$0xf]
    %v2263 = vld [vmem:[%s8 + $0x84] sm:$0xf]
    %v2264 = vld [vmem:[%s8 + $0x88] sm:$0xf]
    %v2265 = vld [vmem:[%s8 + $0x8c] sm:$0xf]
    %v2266 = vld [vmem:[%s8 + $0x90] sm:$0xf]
    %v2267 = vld [vmem:[%s8 + $0x94] sm:$0xf]
    %v2268 = vld [vmem:[%s8 + $0x98] sm:$0xf]
    %v2269 = vld [vmem:[%s8 + $0x9c] sm:$0xf]
    %v2270 = vld [vmem:[%s8 + $0xa0] sm:$0xf]
    %v2271 = vld [vmem:[%s8 + $0xa4] sm:$0xf]
    %v2272 = vld [vmem:[%s8 + $0xa8] sm:$0xf]
    %v2273 = vld [vmem:[%s8 + $0xac] sm:$0xf]
    %v2274 = vld [vmem:[%s8 + $0xb0] sm:$0xf]
    %v2275 = vld [vmem:[%s8 + $0xb4] sm:$0xf]
    %v2276 = vld [vmem:[%s8 + $0xb8] sm:$0xf]
    %v2277 = vld [vmem:[%s8 + $0xbc] sm:$0xf]
    %v2278 = vld [vmem:[%s8 + $0xc0] sm:$0xf]
    %v2279 = vld [vmem:[%s8 + $0xc4] sm:$0xf]
    %v2280 = vld [vmem:[%s8 + $0xc8] sm:$0xf]
    %v2281 = vld [vmem:[%s8 + $0xcc] sm:$0xf]
    %v2282 = vld [vmem:[%s8 + $0xd0] sm:$0xf]
    %v2283 = vld [vmem:[%s8 + $0xd4] sm:$0xf]
    %v2284 = vld [vmem:[%s8 + $0xd8] sm:$0xf]
    %v2285 = vld [vmem:[%s8 + $0xdc] sm:$0xf]
    %v2286 = vld [vmem:[%s8 + $0xe0] sm:$0xf]
    %v2287 = vld [vmem:[%s8 + $0xe4] sm:$0xf]
    %v2288 = vld [vmem:[%s8 + $0xe8] sm:$0xf]
    %v2289 = vld [vmem:[%s8 + $0xec] sm:$0xf]
    %v2290 = vld [vmem:[%s8 + $0xf0] sm:$0xf]
    %v2291 = vld [vmem:[%s8 + $0xf4] sm:$0xf]
    %v2292 = vld [vmem:[%s8 + $0xf8] sm:$0xf]
    %v2293 = vld [vmem:[%s8 + $0xfc] sm:$0xf]
    %v2294 = vld [vmem:[%s9] sm:$0x1]
    %v2296 = vlaneseq
    %v2297 = vshrl.u32 %v2296, 7
    %v2298 = vsub.s32 0, %v2297
    %v2299 = vrot.slane %v2294, %v2298
    %v2365 = vunpack.c.l.b16 %v2230
    %v2366 = vunpack.c.l.b16 %v2231
    %v2367 = vunpack.c.l.b16 %v2232
    %v2368 = vunpack.c.l.b16 %v2233
    %v2369 = vunpack.c.l.b16 %v2234
    %v2370 = vunpack.c.l.b16 %v2235
    %v2371 = vunpack.c.l.b16 %v2236
    %v2372 = vunpack.c.l.b16 %v2237
    %v2373 = vunpack.c.l.b16 %v2238
    %v2374 = vunpack.c.l.b16 %v2239
    %v2375 = vunpack.c.l.b16 %v2240
    %v2376 = vunpack.c.l.b16 %v2241
    %v2377 = vunpack.c.l.b16 %v2242
    %v2378 = vunpack.c.l.b16 %v2243
    %v2379 = vunpack.c.l.b16 %v2244
    %v2380 = vunpack.c.l.b16 %v2245
    %v2381 = vunpack.c.l.b16 %v2246
    %v2382 = vunpack.c.l.b16 %v2247
    %v2383 = vunpack.c.l.b16 %v2248
    %v2384 = vunpack.c.l.b16 %v2249
    %v2385 = vunpack.c.l.b16 %v2250
    %v2386 = vunpack.c.l.b16 %v2251
    %v2387 = vunpack.c.l.b16 %v2252
    %v2388 = vunpack.c.l.b16 %v2253
    %v2389 = vunpack.c.l.b16 %v2254
    %v2390 = vunpack.c.l.b16 %v2255
    %v2391 = vunpack.c.l.b16 %v2256
    %v2392 = vunpack.c.l.b16 %v2257
    %v2393 = vunpack.c.l.b16 %v2258
    %v2394 = vunpack.c.l.b16 %v2259
    %v2395 = vunpack.c.l.b16 %v2260
    %v2396 = vunpack.c.l.b16 %v2261
    %v2397 = vunpack.c.l.b16 %v2262
    %v2398 = vunpack.c.l.b16 %v2263
    %v2399 = vunpack.c.l.b16 %v2264
    %v2400 = vunpack.c.l.b16 %v2265
    %v2401 = vunpack.c.l.b16 %v2266
    %v2402 = vunpack.c.l.b16 %v2267
    %v2403 = vunpack.c.l.b16 %v2268
    %v2404 = vunpack.c.l.b16 %v2269
    %v2405 = vunpack.c.l.b16 %v2270
    %v2406 = vunpack.c.l.b16 %v2271
    %v2407 = vunpack.c.l.b16 %v2272
    %v2408 = vunpack.c.l.b16 %v2273
    %v2409 = vunpack.c.l.b16 %v2274
    %v2410 = vunpack.c.l.b16 %v2275
    %v2411 = vunpack.c.l.b16 %v2276
    %v2412 = vunpack.c.l.b16 %v2277
    %v2413 = vunpack.c.l.b16 %v2278
    %v2414 = vunpack.c.l.b16 %v2279
    %v2415 = vunpack.c.l.b16 %v2280
    %v2416 = vunpack.c.l.b16 %v2281
    %v2417 = vunpack.c.l.b16 %v2282
    %v2418 = vunpack.c.l.b16 %v2283
    %v2419 = vunpack.c.l.b16 %v2284
    %v2420 = vunpack.c.l.b16 %v2285
    %v2421 = vunpack.c.l.b16 %v2286
    %v2422 = vunpack.c.l.b16 %v2287
    %v2423 = vunpack.c.l.b16 %v2288
    %v2424 = vunpack.c.l.b16 %v2289
    %v2425 = vunpack.c.l.b16 %v2290
    %v2426 = vunpack.c.l.b16 %v2291
    %v2427 = vunpack.c.l.b16 %v2292
    %v2428 = vunpack.c.l.b16 %v2293
    %v2429 = vpack.c.b16 %v2366, %v2365
    %v2430 = vpack.c.b16 %v2368, %v2367
    %v2431 = vpack.c.b16 %v2370, %v2369
    %v2432 = vpack.c.b16 %v2372, %v2371
    %v2433 = vpack.c.b16 %v2374, %v2373
    %v2434 = vpack.c.b16 %v2376, %v2375
    %v2435 = vpack.c.b16 %v2378, %v2377
    %v2436 = vpack.c.b16 %v2380, %v2379
    %v2437 = vpack.c.b16 %v2382, %v2381
    %v2438 = vpack.c.b16 %v2384, %v2383
    %v2439 = vpack.c.b16 %v2386, %v2385
    %v2440 = vpack.c.b16 %v2388, %v2387
    %v2441 = vpack.c.b16 %v2390, %v2389
    %v2442 = vpack.c.b16 %v2392, %v2391
    %v2443 = vpack.c.b16 %v2394, %v2393
    %v2444 = vpack.c.b16 %v2396, %v2395
    %v2445 = vpack.c.b16 %v2398, %v2397
    %v2446 = vpack.c.b16 %v2400, %v2399
    %v2447 = vpack.c.b16 %v2402, %v2401
    %v2448 = vpack.c.b16 %v2404, %v2403
    %v2449 = vpack.c.b16 %v2406, %v2405
    %v2450 = vpack.c.b16 %v2408, %v2407
    %v2451 = vpack.c.b16 %v2410, %v2409
    %v2452 = vpack.c.b16 %v2412, %v2411
    %v2453 = vpack.c.b16 %v2414, %v2413
    %v2454 = vpack.c.b16 %v2416, %v2415
    %v2455 = vpack.c.b16 %v2418, %v2417
    %v2456 = vpack.c.b16 %v2420, %v2419
    %v2457 = vpack.c.b16 %v2422, %v2421
    %v2458 = vpack.c.b16 %v2424, %v2423
    %v2459 = vpack.c.b16 %v2426, %v2425
    %v2460 = vpack.c.b16 %v2428, %v2427
    %2493 = vmatprep.subr.bf16.mxu0 0
    %2494 = vmatpush1.bf16.msra.mxu0 %v2429
    %2495 = vmatprep.subr.bf16.mxu0 0
    %2496 = vmatpush1.bf16.msra.mxu0 %v2430
    %2497 = vmatprep.subr.bf16.mxu0 0
    %2498 = vmatpush1.bf16.msra.mxu0 %v2431
    %2499 = vmatprep.subr.bf16.mxu0 0
    %2500 = vmatpush1.bf16.msra.mxu0 %v2432
    %2501 = vmatprep.subr.bf16.mxu0 0
    %2502 = vmatpush1.bf16.msra.mxu0 %v2433
    %2503 = vmatprep.subr.bf16.mxu0 0
    %2504 = vmatpush1.bf16.msra.mxu0 %v2434
    %2505 = vmatprep.subr.bf16.mxu0 0
    %2506 = vmatpush1.bf16.msra.mxu0 %v2435
    %2507 = vmatprep.subr.bf16.mxu0 0
    %2508 = vmatpush1.bf16.msra.mxu0 %v2436
    %2509 = vmatprep.subr.bf16.mxu0 0
    %2510 = vmatpush1.bf16.msra.mxu0 %v2437
    %2511 = vmatprep.subr.bf16.mxu0 0
    %2512 = vmatpush1.bf16.msra.mxu0 %v2438
    %2513 = vmatprep.subr.bf16.mxu0 0
    %2514 = vmatpush1.bf16.msra.mxu0 %v2439
    %2515 = vmatprep.subr.bf16.mxu0 0
    %2516 = vmatpush1.bf16.msra.mxu0 %v2440
    %2517 = vmatprep.subr.bf16.mxu0 0
    %2518 = vmatpush1.bf16.msra.mxu0 %v2441
    %2519 = vmatprep.subr.bf16.mxu0 0
    %2520 = vmatpush1.bf16.msra.mxu0 %v2442
    %2521 = vmatprep.subr.bf16.mxu0 0
    %2522 = vmatpush1.bf16.msra.mxu0 %v2443
    %2523 = vmatprep.subr.bf16.mxu0 0
    %2524 = vmatpush1.bf16.msra.mxu0 %v2444
    %2525 = vmatprep.mubr.bf16.mxu0 %v2227
    %2526 = vmatmul.mubr.bf16.gmra.mrb[0].mxu0 %v2226
    %v2527 = vpop.f32.mrb[0].mxu0
    %v2528 = vadd.f32 %v2299, %v2527
    %v2529 = vpop.f32.mrb[0].mxu0
    %v2530 = vpop.f32.mrb[0].mxu0
    %v2531 = vpop.f32.mrb[0].mxu0
    %2532 = vdwg.mxu0
    %2533 = vmatprep.subr.bf16.mxu0 0
    %2534 = vmatpush1.bf16.msra.mxu0 %v2445
    %2535 = vmatprep.subr.bf16.mxu0 0
    %2536 = vmatpush1.bf16.msra.mxu0 %v2446
    %2537 = vmatprep.subr.bf16.mxu0 0
    %2538 = vmatpush1.bf16.msra.mxu0 %v2447
    %2539 = vmatprep.subr.bf16.mxu0 0
    %2540 = vmatpush1.bf16.msra.mxu0 %v2448
    %2541 = vmatprep.subr.bf16.mxu0 0
    %2542 = vmatpush1.bf16.msra.mxu0 %v2449
    %2543 = vmatprep.subr.bf16.mxu0 0
    %2544 = vmatpush1.bf16.msra.mxu0 %v2450
    %2545 = vmatprep.subr.bf16.mxu0 0
    %2546 = vmatpush1.bf16.msra.mxu0 %v2451
    %2547 = vmatprep.subr.bf16.mxu0 0
    %2548 = vmatpush1.bf16.msra.mxu0 %v2452
    %2549 = vmatprep.subr.bf16.mxu0 0
    %2550 = vmatpush1.bf16.msra.mxu0 %v2453
    %2551 = vmatprep.subr.bf16.mxu0 0
    %2552 = vmatpush1.bf16.msra.mxu0 %v2454
    %2553 = vmatprep.subr.bf16.mxu0 0
    %2554 = vmatpush1.bf16.msra.mxu0 %v2455
    %2555 = vmatprep.subr.bf16.mxu0 0
    %2556 = vmatpush1.bf16.msra.mxu0 %v2456
    %2557 = vmatprep.subr.bf16.mxu0 0
    %2558 = vmatpush1.bf16.msra.mxu0 %v2457
    %2559 = vmatprep.subr.bf16.mxu0 0
    %2560 = vmatpush1.bf16.msra.mxu0 %v2458
    %2561 = vmatprep.subr.bf16.mxu0 0
    %2562 = vmatpush1.bf16.msra.mxu0 %v2459
    %2563 = vmatprep.subr.bf16.mxu0 0
    %2564 = vmatpush1.bf16.msra.mxu0 %v2460
    %2565 = vmatprep.mubr.bf16.mxu0 %v2229
    %2566 = vmatmul.mubr.bf16.gmra.mrb[0].mxu0 %v2228
    %v2567 = vpop.f32.mrb[0].mxu0
    %v2568 = vadd.f32 %v2528, %v2567
    %v2569 = vpop.f32.mrb[0].mxu0
    %v2570 = vpop.f32.mrb[0].mxu0
    %v2571 = vpop.f32.mrb[0].mxu0
    %2572 = vdwg.mxu0
    %v2573 = vld [vmem:[%s10] sm:$0xf]
    %v2575 = vlaneseq
    %v2576 = vshrl.u32 %v2575, 7
    %v2577 = vsub.s32 0, %v2576
    %v2578 = vrot.slane %v2573, %v2577
    %v2579 = vlaneseq
    %v2580 = vshrl.u32 %v2579, 7
    %v2581 = vsub.s32 1, %v2580
    %v2582 = vrot.slane %v2573, %v2581
    %v2583 = vlaneseq
    %v2584 = vshrl.u32 %v2583, 7
    %v2585 = vsub.s32 2, %v2584
    %v2586 = vrot.slane %v2573, %v2585
    %v2587 = vlaneseq
    %v2588 = vshrl.u32 %v2587, 7
    %v2589 = vsub.s32 3, %v2588
    %v2590 = vrot.slane %v2573, %v2589
    %v2595 = vmul.f32 %v2222, %v2578
    %v2596 = vmul.f32 %v2223, %v2582
    %v2597 = vmul.f32 %v2224, %v2586
    %v2598 = vmul.f32 %v2225, %v2590
    %v2599 = vsel %vm951, %v2595, 0.0
    %v2600 = vsel %vm951, %v2596, 0.0
    %v2601 = vadd.f32 %v2599, %v2600
    %v2602 = vsel %vm951, %v2597, 0.0
    %v2603 = vadd.f32 %v2601, %v2602
    %v2604 = vsel %vm951, %v2598, 0.0
    %v2605 = vadd.f32 %v2603, %v2604
    %2606 = vadd.xlane.f32.xlu0 %v2605
    %v2607 = vpop.xlane.xlu0 %2606
    %v2608 = vld [vmem:[#allocation4] sm:$0x1]
    %v2610 = vlaneseq
    %v2611 = vshrl.u32 %v2610, 7
    %v2612 = vsub.s32 0, %v2611
    %v2613 = vrot.slane %v2608, %v2612
    %v2615 = vadd.f32 %v2607, %v2613
    %vm2616 = vcmask 41984
    %v2617 = vsel %vm2616, %v2568, 0.0
    %2618 = vadd.xlane.f32.xlu0 %v2617
    %v2619 = vpop.xlane.xlu0 %2618
    %v2620 = vrot.slane %v2619, 4
    %v2621 = vadd.f32 %v2619, %v2620
    %v2622 = vrot.slane %v2621, 2
    %v2623 = vadd.f32 %v2621, %v2622
    %v2624 = vrot.slane %v2623, 1
    %v2625 = vadd.f32 %v2623, %v2624
    %s2626 = vtos %v2625
    %v2627 = vstv %s2626
    %v2628 = vmul.f32 %v2627, 0.083333336
    %2630 = vset.pattern.permute.xlu0 0
    %2631 = vperm.xlu0 %2630, %v2615
    %v2632 = vpop.permute.xlu0 %2631
    %v2634 = vadd.f32 %v2632, %v2568
    %v2635 = vsub.f32 %v2634, %v2628
    %2636 = vst.msk [vmem:[#allocation5] sm:$0x3] %vm2616, %v2635
    // Predicated region
    $region87: #{dueling_cnn_dqn_forward.1} parent=1 // pred_check
      _
    $region88: #{dueling_cnn_dqn_forward.1} parent=1 // pred_check_branch
      %2638 = sbr.rel (0) target = $region90
    $region89: #{dueling_cnn_dqn_forward.1} parent=1 // pred_region
      %s2640 = ssub.s32 32, 32
      %2641 = vsyncadd [#allocation6], %s2640
      %s2643 = sshll.u32 [#allocation5], 4
      %s2644 = int_to_ptr.vmem [resolvable:$true] %s2643
      %2646 = dma.vmem_to_hbm [thread:$0]  %s2644, 32, %s13, [#allocation6]
    $region90: #{dueling_cnn_dqn_forward.1} parent=1 // pred_fallthru
      _
    // Predicated region
    $region91: #{dueling_cnn_dqn_forward.1} parent=1 // pred_check
      _
    $region92: #{dueling_cnn_dqn_forward.1} parent=1 // pred_check_branch
      %2648 = sbr.rel (0) target = $region94
    $region93: #{dueling_cnn_dqn_forward.1} parent=1 // pred_region
      %2649 = dma.done [#allocation6], 32
    $region94: #{dueling_cnn_dqn_forward.1} parent=1 // pred_fallthru
      _
    %2650 = vsyncpa [#allocation6], 1
  %2651 = vsyncmov [#allocation3]
  %s2652 = vpop.sfrf %2651
  %p2653 = scmp.eq.s32.totalorder %s2652, 0
  %p2654 = pneg %p2653
  %2656 = shalt.err (%p2654)

</llo_original>
